<compile_context>
chip_gen: v5e
topology: v5e:2x2
jax: 0.10.0
libtpu: 0.0.40
codegen_flags: <defaults>
</compile_context>

<pallas_src>
import jax
import jax.numpy as jnp
from jax.experimental import pallas as pl
from jax.experimental.pallas import tpu as pltpu

EPS = 1e-5
LAYER_SIZES = [784, 512, 256, 128, 64, 10]
H4_PAD = 128      # fc4 outputs padded 64 -> 128 (lane-dense intermediate)
OUT_PAD = 128     # 10 padded up to one full lane tile
NEG_BIG = -1e30   # pad-column bias so exp(logit - max) == 0 (kept in f32!)


def enhanced_mlp_kernel(
    x_ref,
    w1_ref, b1_ref,
    w2_ref, b2_ref,
    w3_ref, b3_ref,
    w4_ref, b4_ref,
    w5_ref, b5_ref,
    out_ref,
):
    """One batch tile: 5 matmuls (bf16 MXU, f32 acc), ReLU, log_softmax."""

    def linear(h, w_ref, b_ref):
        # bf16 x bf16 -> f32 accumulation on the MXU, bias add in f32.
        return jnp.dot(h.astype(jnp.bfloat16), w_ref[...],
                       preferred_element_type=jnp.float32) + b_ref[...]

    def linear_relu(h, w_ref, b_ref):
        return jnp.maximum(linear(h, w_ref, b_ref), 0.0)

    h = x_ref[...]                                   # (TB, 784) f32, cast in-kernel
    h = linear_relu(h, w1_ref, b1_ref)               # BN1 folded; dropout = id
    h = linear_relu(h, w2_ref, b2_ref)               # BN2 folded
    h = linear_relu(h, w3_ref, b3_ref)               # BN3 folded
    h = linear_relu(h, w4_ref, b4_ref)               # BN4 folded, padded to 128
    logits = linear(h, w5_ref, b5_ref)               # (TB, 128), pad cols ~ -1e30

    # Numerically stable log_softmax over the lane-dense 128-wide axis (f32).
    m = jnp.max(logits, axis=-1, keepdims=True)
    lse = m + jnp.log(jnp.sum(jnp.exp(logits - m), axis=-1, keepdims=True))
    out_ref[...] = logits - lse


def init_params(key):
    """Deterministic PyTorch-style init: U(-1/sqrt(fan_in), 1/sqrt(fan_in))."""
    params = []
    for i in range(5):
        fan_in, fan_out = LAYER_SIZES[i], LAYER_SIZES[i + 1]
        key, kw, kb = jax.random.split(key, 3)
        bound = 1.0 / jnp.sqrt(jnp.float32(fan_in))
        w = jax.random.uniform(kw, (fan_in, fan_out), jnp.float32, -bound, bound)
        b = jax.random.uniform(kb, (1, fan_out), jnp.float32, -bound, bound)
        params.append((w, b))

    bn_params = []
    for i in range(4):  # bn1..bn4 on 512, 256, 128, 64
        n = LAYER_SIZES[i + 1]
        bn_params.append((jnp.ones((1, n), jnp.float32),    # gamma
                          jnp.zeros((1, n), jnp.float32),   # beta
                          jnp.zeros((1, n), jnp.float32),   # running_mean
                          jnp.ones((1, n), jnp.float32)))   # running_var
    return params, bn_params


def prepare_folded_params(params, bn_params):
    """Fold eval-mode BN into the Linears, pad fc4/fc5 lane-dense, cast bf16."""
    folded = []
    for i in range(5):
        w, b = params[i]
        if i < 4:
            gamma, beta, mu, var = bn_params[i]
            scale = gamma * jax.lax.rsqrt(var + EPS)          # (1, out)
            w = w * scale                                     # scale columns
            b = b * scale + (beta - mu * scale)
        if i == 3:
            # fc4: pad outputs 64 -> 128 with zero weight cols / zero bias
            # (ReLU(0) == 0 on the pad cols).
            pad = H4_PAD - LAYER_SIZES[4]
            w = jnp.pad(w, ((0, 0), (0, pad)))
            b = jnp.pad(b, ((0, 0), (0, pad)))
        if i == 4:
            # fc5: pad inputs 64 -> 128 (zero rows match zero h4 pad cols) and
            # outputs 10 -> 128 (zero weight cols, -1e30 bias on pad cols).
            kpad = H4_PAD - LAYER_SIZES[4]
            npad = OUT_PAD - LAYER_SIZES[5]
            w = jnp.pad(w, ((0, kpad), (0, npad)))
            b = jnp.pad(b, ((0, 0), (0, npad)), constant_values=NEG_BIG)
        # Weights bf16 for the MXU; biases stay f32 (keeps -1e30 finite).
        folded.append((w.astype(jnp.bfloat16), b.astype(jnp.float32)))
    return folded


def _round_up(x, m):
    return ((x + m - 1) // m) * m


def _pick_batch_tile(B):
    """Tile the batch so large batches amortize grid overhead and the grid
    has >= 2 steps (v7x megacore) whenever B >= 512."""
    if B >= 2048:
        return 1024
    if B >= 512:
        return _round_up(-(-B // 2), 256)   # ceil(B/2) rounded to 256
    return _round_up(B, 16)                 # bf16 sublane packing for tiny B


@jax.jit
def enhanced_mlp_forward(x, folded):
    B = x.shape[0]
    # No feature padding / pre-cast: pass (B, 784) f32 straight to the kernel
    # (full last dim is a legal BlockSpec); bf16 cast happens in-kernel.
    x2d = x.reshape(B, 784).astype(jnp.float32)

    TB = _pick_batch_tile(B)
    B_pad = _round_up(B, TB)
    if B_pad != B:
        x2d = jnp.pad(x2d, ((0, B_pad - B), (0, 0)))
    grid = (B_pad // TB,)

    # Per-tile input/output specs; weights full-array & resident across steps.
    x_spec = pl.BlockSpec((TB, 784), lambda i: (i, 0))
    out_spec = pl.BlockSpec((TB, OUT_PAD), lambda i: (i, 0))
    weight_specs = []
    args = [x2d]
    for w, b in folded:
        weight_specs.append(pl.BlockSpec(w.shape, lambda i: (0, 0)))
        weight_specs.append(pl.BlockSpec(b.shape, lambda i: (0, 0)))
        args.extend([w, b])

    weight_bytes = sum(w.size * 2 + b.size * 4 for w, b in folded)
    flops = 2 * B_pad * (784 * 512 + 512 * 256 + 256 * 128
                         + 128 * H4_PAD + H4_PAD * OUT_PAD)
    cost = pl.CostEstimate(
        flops=flops,
        transcendentals=B_pad * (OUT_PAD + 1),
        bytes_accessed=B_pad * 784 * 4 + weight_bytes + B_pad * OUT_PAD * 4,
    )

    out = pl.pallas_call(
        enhanced_mlp_kernel,
        out_shape=jax.ShapeDtypeStruct((B_pad, OUT_PAD), jnp.float32),
        grid=grid,
        in_specs=[x_spec] + weight_specs,
        out_specs=out_spec,
        compiler_params=pltpu.CompilerParams(
            dimension_semantics=("parallel",),
            # Real footprint at TB=1024 is ~20 MiB (x tile 3.2 MiB x 2 bufs,
            # weights ~1.2 MiB x 2, out 0.5 MiB x 2, f32 intermediates);
            # 40 MiB leaves headroom and stays well under v7x's 64 MiB.
            vmem_limit_bytes=40 * 1024 * 1024,
        ),
        cost_estimate=cost,
    )(*args)
    return out[:B, :LAYER_SIZES[-1]]


def reference_forward(x, params, bn_params):
    """Pure-JAX f32 reference (unfolded BN, eval mode) for a sanity check."""
    h = x.reshape(x.shape[0], 784).astype(jnp.float32)
    for i in range(4):
        w, b = params[i]
        g, bt, mu, var = bn_params[i]
        h = h @ w + b
        h = g * (h - mu) / jnp.sqrt(var + EPS) + bt
        h = jnp.maximum(h, 0.0)
    w5, b5 = params[4]
    logits = h @ w5 + b5
    return jax.nn.log_softmax(logits, axis=1)


if __name__ == "__main__":
    key = jax.random.PRNGKey(0)
    k_params, k_x = jax.random.split(key)

    params, bn_params = init_params(k_params)
    folded = prepare_folded_params(params, bn_params)

    # Small MNIST-like batch: NCHW (B, 1, 28, 28); forward flattens to (B, 784).
    B = 8
    x = jax.random.normal(k_x, (B, 1, 28, 28), jnp.float32)

    out = enhanced_mlp_forward(x, folded)
    out = jax.block_until_ready(out)

    ref = reference_forward(x, params, bn_params)
    assert out.shape == (B, 10)
    # bf16 matmul inputs -> looser tolerance vs. the f32 reference.
    assert jnp.allclose(out, ref, atol=5e-2, rtol=5e-2), "mismatch vs JAX reference"
    # log_softmax rows should exponentiate-sum to ~1
    assert jnp.allclose(jnp.sum(jnp.exp(out), axis=1), 1.0, atol=1e-3)

    print("KERNEL_OK")
</pallas_src>

<mosaic_0001>
module attributes {stable_mosaic.version = 11 : i64} {
  func.func @enhanced_mlp_kernel(%arg0: i32, %arg1: memref<16x784xf32, #tpu.memory_space<vmem>>, %arg2: memref<784x512xbf16, #tpu.memory_space<vmem>>, %arg3: memref<1x512xf32, #tpu.memory_space<vmem>>, %arg4: memref<512x256xbf16, #tpu.memory_space<vmem>>, %arg5: memref<1x256xf32, #tpu.memory_space<vmem>>, %arg6: memref<256x128xbf16, #tpu.memory_space<vmem>>, %arg7: memref<1x128xf32, #tpu.memory_space<vmem>>, %arg8: memref<128x128xbf16, #tpu.memory_space<vmem>>, %arg9: memref<1x128xf32, #tpu.memory_space<vmem>>, %arg10: memref<128x128xbf16, #tpu.memory_space<vmem>>, %arg11: memref<1x128xf32, #tpu.memory_space<vmem>>, %arg12: memref<16x128xf32, #tpu.memory_space<vmem>>) attributes {dimension_semantics = [#tpu.dimension_semantics<parallel>], iteration_bounds = array<i64: 1>, scalar_prefetch = 0 : i64, scratch_operands = 0 : i64, tpu.core_type = #tpu.core_type<tc>, window_params = [{transform_indices = @transform_0, window_bounds = array<i64: 16, 784>}, {pipeline_mode = #tpu.pipeline_mode<synchronous>, transform_indices = @transform_1, window_bounds = array<i64: 784, 512>}, {pipeline_mode = #tpu.pipeline_mode<synchronous>, transform_indices = @transform_2, window_bounds = array<i64: 1, 512>}, {pipeline_mode = #tpu.pipeline_mode<synchronous>, transform_indices = @transform_3, window_bounds = array<i64: 512, 256>}, {pipeline_mode = #tpu.pipeline_mode<synchronous>, transform_indices = @transform_4, window_bounds = array<i64: 1, 256>}, {pipeline_mode = #tpu.pipeline_mode<synchronous>, transform_indices = @transform_5, window_bounds = array<i64: 256, 128>}, {pipeline_mode = #tpu.pipeline_mode<synchronous>, transform_indices = @transform_6, window_bounds = array<i64: 1, 128>}, {pipeline_mode = #tpu.pipeline_mode<synchronous>, transform_indices = @transform_7, window_bounds = array<i64: 128, 128>}, {pipeline_mode = #tpu.pipeline_mode<synchronous>, transform_indices = @transform_8, window_bounds = array<i64: 1, 128>}, {pipeline_mode = #tpu.pipeline_mode<synchronous>, transform_indices = @transform_9, window_bounds = array<i64: 128, 128>}, {pipeline_mode = #tpu.pipeline_mode<synchronous>, transform_indices = @transform_10, window_bounds = array<i64: 1, 128>}, {transform_indices = @transform_11, window_bounds = array<i64: 16, 128>}]} {
    %c0 = arith.constant 0 : index
    %c0_0 = arith.constant 0 : index
    %0 = vector.load %arg1[%c0, %c0_0] : memref<16x784xf32, #tpu.memory_space<vmem>>, vector<16x784xf32>
    %1 = arith.truncf %0 : vector<16x784xf32> to vector<16x784xbf16>
    %c0_1 = arith.constant 0 : index
    %c0_2 = arith.constant 0 : index
    %2 = vector.load %arg2[%c0_1, %c0_2] : memref<784x512xbf16, #tpu.memory_space<vmem>>, vector<784x512xbf16>
    %cst = arith.constant dense<0.000000e+00> : vector<16x512xf32>
    %3 = tpu.matmul %1, %2, %cst {dimension_numbers = #tpu.dot_dimension_numbers<[1], [0], [0], [1], [0, 0, 1, 1], [], []>} : vector<16x784xbf16>, vector<784x512xbf16>, vector<16x512xf32> -> vector<16x512xf32>
    %c0_3 = arith.constant 0 : index
    %c0_4 = arith.constant 0 : index
    %4 = vector.load %arg3[%c0_3, %c0_4] : memref<1x512xf32, #tpu.memory_space<vmem>>, vector<1x512xf32>
    %5 = vector.broadcast %4 : vector<1x512xf32> to vector<16x512xf32>
    %6 = arith.addf %3, %5 : vector<16x512xf32>
    %cst_5 = arith.constant 0.000000e+00 : f32
    %7 = vector.broadcast %cst_5 : f32 to vector<16x512xf32>
    %8 = arith.maximumf %6, %7 : vector<16x512xf32>
    %9 = arith.truncf %8 : vector<16x512xf32> to vector<16x512xbf16>
    %c0_6 = arith.constant 0 : index
    %c0_7 = arith.constant 0 : index
    %10 = vector.load %arg4[%c0_6, %c0_7] : memref<512x256xbf16, #tpu.memory_space<vmem>>, vector<512x256xbf16>
    %cst_8 = arith.constant dense<0.000000e+00> : vector<16x256xf32>
    %11 = tpu.matmul %9, %10, %cst_8 {dimension_numbers = #tpu.dot_dimension_numbers<[1], [0], [0], [1], [0, 0, 1, 1], [], []>} : vector<16x512xbf16>, vector<512x256xbf16>, vector<16x256xf32> -> vector<16x256xf32>
    %c0_9 = arith.constant 0 : index
    %c0_10 = arith.constant 0 : index
    %12 = vector.load %arg5[%c0_9, %c0_10] : memref<1x256xf32, #tpu.memory_space<vmem>>, vector<1x256xf32>
    %13 = vector.broadcast %12 : vector<1x256xf32> to vector<16x256xf32>
    %14 = arith.addf %11, %13 : vector<16x256xf32>
    %cst_11 = arith.constant 0.000000e+00 : f32
    %15 = vector.broadcast %cst_11 : f32 to vector<16x256xf32>
    %16 = arith.maximumf %14, %15 : vector<16x256xf32>
    %17 = arith.truncf %16 : vector<16x256xf32> to vector<16x256xbf16>
    %c0_12 = arith.constant 0 : index
    %c0_13 = arith.constant 0 : index
    %18 = vector.load %arg6[%c0_12, %c0_13] : memref<256x128xbf16, #tpu.memory_space<vmem>>, vector<256x128xbf16>
    %cst_14 = arith.constant dense<0.000000e+00> : vector<16x128xf32>
    %19 = tpu.matmul %17, %18, %cst_14 {dimension_numbers = #tpu.dot_dimension_numbers<[1], [0], [0], [1], [0, 0, 1, 1], [], []>} : vector<16x256xbf16>, vector<256x128xbf16>, vector<16x128xf32> -> vector<16x128xf32>
    %c0_15 = arith.constant 0 : index
    %c0_16 = arith.constant 0 : index
    %20 = vector.load %arg7[%c0_15, %c0_16] : memref<1x128xf32, #tpu.memory_space<vmem>>, vector<1x128xf32>
    %21 = vector.broadcast %20 : vector<1x128xf32> to vector<16x128xf32>
    %22 = arith.addf %19, %21 : vector<16x128xf32>
    %cst_17 = arith.constant 0.000000e+00 : f32
    %23 = vector.broadcast %cst_17 : f32 to vector<16x128xf32>
    %24 = arith.maximumf %22, %23 : vector<16x128xf32>
    %25 = arith.truncf %24 : vector<16x128xf32> to vector<16x128xbf16>
    %c0_18 = arith.constant 0 : index
    %c0_19 = arith.constant 0 : index
    %26 = vector.load %arg8[%c0_18, %c0_19] : memref<128x128xbf16, #tpu.memory_space<vmem>>, vector<128x128xbf16>
    %cst_20 = arith.constant dense<0.000000e+00> : vector<16x128xf32>
    %27 = tpu.matmul %25, %26, %cst_20 {dimension_numbers = #tpu.dot_dimension_numbers<[1], [0], [0], [1], [0, 0, 1, 1], [], []>} : vector<16x128xbf16>, vector<128x128xbf16>, vector<16x128xf32> -> vector<16x128xf32>
    %c0_21 = arith.constant 0 : index
    %c0_22 = arith.constant 0 : index
    %28 = vector.load %arg9[%c0_21, %c0_22] : memref<1x128xf32, #tpu.memory_space<vmem>>, vector<1x128xf32>
    %29 = vector.broadcast %28 : vector<1x128xf32> to vector<16x128xf32>
    %30 = arith.addf %27, %29 : vector<16x128xf32>
    %cst_23 = arith.constant 0.000000e+00 : f32
    %31 = vector.broadcast %cst_23 : f32 to vector<16x128xf32>
    %32 = arith.maximumf %30, %31 : vector<16x128xf32>
    %33 = arith.truncf %32 : vector<16x128xf32> to vector<16x128xbf16>
    %c0_24 = arith.constant 0 : index
    %c0_25 = arith.constant 0 : index
    %34 = vector.load %arg10[%c0_24, %c0_25] : memref<128x128xbf16, #tpu.memory_space<vmem>>, vector<128x128xbf16>
    %cst_26 = arith.constant dense<0.000000e+00> : vector<16x128xf32>
    %35 = tpu.matmul %33, %34, %cst_26 {dimension_numbers = #tpu.dot_dimension_numbers<[1], [0], [0], [1], [0, 0, 1, 1], [], []>} : vector<16x128xbf16>, vector<128x128xbf16>, vector<16x128xf32> -> vector<16x128xf32>
    %c0_27 = arith.constant 0 : index
    %c0_28 = arith.constant 0 : index
    %36 = vector.load %arg11[%c0_27, %c0_28] : memref<1x128xf32, #tpu.memory_space<vmem>>, vector<1x128xf32>
    %37 = vector.broadcast %36 : vector<1x128xf32> to vector<16x128xf32>
    %38 = arith.addf %35, %37 : vector<16x128xf32>
    %cst_29 = arith.constant dense<0xFF800000> : vector<16xf32>
    %39 = vector.multi_reduction <maximumf>, %38, %cst_29 [1] : vector<16x128xf32> to vector<16xf32>
    %40 = vector.shape_cast %39 : vector<16xf32> to vector<16x1xf32>
    %41 = vector.broadcast %40 : vector<16x1xf32> to vector<16x128xf32>
    %42 = arith.subf %38, %41 : vector<16x128xf32>
    %43 = math.exp %42 : vector<16x128xf32>
    %cst_30 = arith.constant dense<0.000000e+00> : vector<16xf32>
    %44 = vector.multi_reduction <add>, %43, %cst_30 [1] : vector<16x128xf32> to vector<16xf32>
    %45 = vector.shape_cast %44 : vector<16xf32> to vector<16x1xf32>
    %46 = math.log %45 : vector<16x1xf32>
    %47 = arith.addf %40, %46 : vector<16x1xf32>
    %48 = vector.broadcast %47 : vector<16x1xf32> to vector<16x128xf32>
    %49 = arith.subf %38, %48 : vector<16x128xf32>
    %c0_31 = arith.constant 0 : index
    %c0_32 = arith.constant 0 : index
    %50 = vector.load %arg12[%c0_31, %c0_32] : memref<16x128xf32, #tpu.memory_space<vmem>>, vector<16x128xf32>
    tpu.vector_store %arg12[%c0_31, %c0_32], %49 {strides = array<i32>} : memref<16x128xf32, #tpu.memory_space<vmem>>, vector<16x128xf32>,
    return
  }
  func.func @transform_0(%arg0: i32) -> (i32, i32) {
    %c0_i32 = arith.constant 0 : i32
    %c0_i32_0 = arith.constant 0 : i32
    return %arg0, %c0_i32 : i32, i32
  }
  func.func @transform_1(%arg0: i32) -> (i32, i32) {
    %c0_i32 = arith.constant 0 : i32
    %c0_i32_0 = arith.constant 0 : i32
    %c0_i32_1 = arith.constant 0 : i32
    return %c0_i32, %c0_i32_0 : i32, i32
  }
  func.func @transform_2(%arg0: i32) -> (i32, i32) {
    %c0_i32 = arith.constant 0 : i32
    %c0_i32_0 = arith.constant 0 : i32
    %c0_i32_1 = arith.constant 0 : i32
    return %c0_i32, %c0_i32_0 : i32, i32
  }
  func.func @transform_3(%arg0: i32) -> (i32, i32) {
    %c0_i32 = arith.constant 0 : i32
    %c0_i32_0 = arith.constant 0 : i32
    %c0_i32_1 = arith.constant 0 : i32
    return %c0_i32, %c0_i32_0 : i32, i32
  }
  func.func @transform_4(%arg0: i32) -> (i32, i32) {
    %c0_i32 = arith.constant 0 : i32
    %c0_i32_0 = arith.constant 0 : i32
    %c0_i32_1 = arith.constant 0 : i32
    return %c0_i32, %c0_i32_0 : i32, i32
  }
  func.func @transform_5(%arg0: i32) -> (i32, i32) {
    %c0_i32 = arith.constant 0 : i32
    %c0_i32_0 = arith.constant 0 : i32
    %c0_i32_1 = arith.constant 0 : i32
    return %c0_i32, %c0_i32_0 : i32, i32
  }
  func.func @transform_6(%arg0: i32) -> (i32, i32) {
    %c0_i32 = arith.constant 0 : i32
    %c0_i32_0 = arith.constant 0 : i32
    %c0_i32_1 = arith.constant 0 : i32
    return %c0_i32, %c0_i32_0 : i32, i32
  }
  func.func @transform_7(%arg0: i32) -> (i32, i32) {
    %c0_i32 = arith.constant 0 : i32
    %c0_i32_0 = arith.constant 0 : i32
    %c0_i32_1 = arith.constant 0 : i32
    return %c0_i32, %c0_i32_0 : i32, i32
  }
  func.func @transform_8(%arg0: i32) -> (i32, i32) {
    %c0_i32 = arith.constant 0 : i32
    %c0_i32_0 = arith.constant 0 : i32
    %c0_i32_1 = arith.constant 0 : i32
    return %c0_i32, %c0_i32_0 : i32, i32
  }
  func.func @transform_9(%arg0: i32) -> (i32, i32) {
    %c0_i32 = arith.constant 0 : i32
    %c0_i32_0 = arith.constant 0 : i32
    %c0_i32_1 = arith.constant 0 : i32
    return %c0_i32, %c0_i32_0 : i32, i32
  }
  func.func @transform_10(%arg0: i32) -> (i32, i32) {
    %c0_i32 = arith.constant 0 : i32
    %c0_i32_0 = arith.constant 0 : i32
    %c0_i32_1 = arith.constant 0 : i32
    return %c0_i32, %c0_i32_0 : i32, i32
  }
  func.func @transform_11(%arg0: i32) -> (i32, i32) {
    %c0_i32 = arith.constant 0 : i32
    %c0_i32_0 = arith.constant 0 : i32
    return %arg0, %c0_i32 : i32, i32
  }
}

</mosaic_0001>

<llo_original>
// kernel: enhanced_mlp_forward.1
$region0: #{enhanced_mlp_forward.1}
  #allocation0 [shape = 'u32[]', space=smem, size = 0x4, offset = 0x4, fixed_abs, tag = 'smem constant byte address 0x4 - core index']
  #allocation1 [shape = 'u32[72,128]{1,0:T(1,128)}', space=vmem, size = 0x9000, scoped, tag = 'internal scratch']
  %s0 = inlined_call_operand.vmem [shape: f32[16,784], index: 0, kind: input, shape index: {}]
  %s1 = inlined_call_operand.hbm [shape: bf16[784,512], index: 1, kind: input, shape index: {}]
  %s2 = inlined_call_operand.vmem [shape: f32[1,512], index: 2, kind: input, shape index: {}]
  %s3 = inlined_call_operand.vmem [shape: bf16[512,256], index: 3, kind: input, shape index: {}]
  %s4 = inlined_call_operand.vmem [shape: f32[1,256], index: 4, kind: input, shape index: {}]
  %s5 = inlined_call_operand.vmem [shape: bf16[256,128], index: 5, kind: input, shape index: {}]
  %s6 = inlined_call_operand.vmem [shape: f32[1,128], index: 6, kind: input, shape index: {}]
  %s7 = inlined_call_operand.vmem [shape: bf16[128,128], index: 7, kind: input, shape index: {}]
  %s8 = inlined_call_operand.vmem [shape: f32[1,128], index: 8, kind: input, shape index: {}]
  %s9 = inlined_call_operand.vmem [shape: bf16[128,128], index: 9, kind: input, shape index: {}]
  %s10 = inlined_call_operand.vmem [shape: f32[1,128], index: 10, kind: input, shape index: {}]
  %s11 = inlined_call_operand.vmem [shape: f32[16,128], index: 11, kind: output, shape index: {}]
  %s12 = sld [smem:[#allocation0]]
  $region58: #{enhanced_mlp_forward.1} parent=0
    _
  %s14 = ssub.s32 1, %s12
  %s15 = scalar_select 0, %s14, %s12
  $region1: #{enhanced_mlp_forward.1} parent=0
    #allocation2 [shape = 'u8[802816]{0}', space=vmem, size = 0xc4000, scoped, tag = 'input window, operand 1, single buffered']
    #allocation3 [shape = 's32[1]{0}', space=sflag, size = 0x4, scoped, tag = 'scoped memory for enhanced_mlp_forward.1']
    %16 = vsyncpa [#allocation3], 0
    // Predicated region
    $region2: #{enhanced_mlp_forward.1} parent=1 // pred_check
      _
    $region3: #{enhanced_mlp_forward.1} parent=1 // pred_check_branch
      %18 = sbr.rel (0) target = $region5
    $region4: #{enhanced_mlp_forward.1} parent=1 // pred_region
      _
    $region5: #{enhanced_mlp_forward.1} parent=1 // pred_fallthru
      _
    // Predicated region
    $region6: #{enhanced_mlp_forward.1} parent=1 // pred_check
      _
    $region7: #{enhanced_mlp_forward.1} parent=1 // pred_check_branch
      %20 = sbr.rel (0) target = $region9
    $region8: #{enhanced_mlp_forward.1} parent=1 // pred_region
      %22 = vsyncadd [#allocation3], 0
      %s23 = sshll.u32 %s1, 4
      %s24 = int_to_ptr.hbm [resolvable:$true] %s23
      %s25 = sshll.u32 [#allocation2], 4
      %s26 = int_to_ptr.vmem [resolvable:$true] %s25
      %31 = dma.hbm_to_vmem [thread:$0]  %s24, 25088, %s26, [#allocation3], 256, 256, 16
    $region9: #{enhanced_mlp_forward.1} parent=1 // pred_fallthru
      _
    // Predicated region
    $region10: #{enhanced_mlp_forward.1} parent=1 // pred_check
      _
    $region11: #{enhanced_mlp_forward.1} parent=1 // pred_check_branch
      %33 = sbr.rel (0) target = $region13
    $region12: #{enhanced_mlp_forward.1} parent=1 // pred_region
      _
    $region13: #{enhanced_mlp_forward.1} parent=1 // pred_fallthru
      _
    // Predicated region
    $region14: #{enhanced_mlp_forward.1} parent=1 // pred_check
      _
    $region15: #{enhanced_mlp_forward.1} parent=1 // pred_check_branch
      %35 = sbr.rel (0) target = $region17
    $region16: #{enhanced_mlp_forward.1} parent=1 // pred_region
      _
    $region17: #{enhanced_mlp_forward.1} parent=1 // pred_fallthru
      _
    // Predicated region
    $region18: #{enhanced_mlp_forward.1} parent=1 // pred_check
      _
    $region19: #{enhanced_mlp_forward.1} parent=1 // pred_check_branch
      %37 = sbr.rel (0) target = $region21
    $region20: #{enhanced_mlp_forward.1} parent=1 // pred_region
      _
    $region21: #{enhanced_mlp_forward.1} parent=1 // pred_fallthru
      _
    // Predicated region
    $region22: #{enhanced_mlp_forward.1} parent=1 // pred_check
      _
    $region23: #{enhanced_mlp_forward.1} parent=1 // pred_check_branch
      %39 = sbr.rel (0) target = $region25
    $region24: #{enhanced_mlp_forward.1} parent=1 // pred_region
      _
    $region25: #{enhanced_mlp_forward.1} parent=1 // pred_fallthru
      _
    // Predicated region
    $region26: #{enhanced_mlp_forward.1} parent=1 // pred_check
      _
    $region27: #{enhanced_mlp_forward.1} parent=1 // pred_check_branch
      %41 = sbr.rel (0) target = $region29
    $region28: #{enhanced_mlp_forward.1} parent=1 // pred_region
      _
    $region29: #{enhanced_mlp_forward.1} parent=1 // pred_fallthru
      _
    // Predicated region
    $region30: #{enhanced_mlp_forward.1} parent=1 // pred_check
      _
    $region31: #{enhanced_mlp_forward.1} parent=1 // pred_check_branch
      %43 = sbr.rel (0) target = $region33
    $region32: #{enhanced_mlp_forward.1} parent=1 // pred_region
      _
    $region33: #{enhanced_mlp_forward.1} parent=1 // pred_fallthru
      _
    // Predicated region
    $region34: #{enhanced_mlp_forward.1} parent=1 // pred_check
      _
    $region35: #{enhanced_mlp_forward.1} parent=1 // pred_check_branch
      %45 = sbr.rel (0) target = $region37
    $region36: #{enhanced_mlp_forward.1} parent=1 // pred_region
      _
    $region37: #{enhanced_mlp_forward.1} parent=1 // pred_fallthru
      _
    // Predicated region
    $region38: #{enhanced_mlp_forward.1} parent=1 // pred_check
      _
    $region39: #{enhanced_mlp_forward.1} parent=1 // pred_check_branch
      %47 = sbr.rel (0) target = $region41
    $region40: #{enhanced_mlp_forward.1} parent=1 // pred_region
      _
    $region41: #{enhanced_mlp_forward.1} parent=1 // pred_fallthru
      _
    // Predicated region
    $region42: #{enhanced_mlp_forward.1} parent=1 // pred_check
      _
    $region43: #{enhanced_mlp_forward.1} parent=1 // pred_check_branch
      %49 = sbr.rel (0) target = $region45
    $region44: #{enhanced_mlp_forward.1} parent=1 // pred_region
      _
    $region45: #{enhanced_mlp_forward.1} parent=1 // pred_fallthru
      _
    // Predicated region
    $region46: #{enhanced_mlp_forward.1} parent=1 // pred_check
      _
    $region47: #{enhanced_mlp_forward.1} parent=1 // pred_check_branch
      %51 = sbr.rel (0) target = $region49
    $region48: #{enhanced_mlp_forward.1} parent=1 // pred_region
      %53 = dma.done [#allocation3], 25088
    $region49: #{enhanced_mlp_forward.1} parent=1 // pred_fallthru
      _
    %v55 = vld [vmem:[%s0] sm:$0xff]
    %v56 = vld [vmem:[%s0 + $0x8] sm:$0xff]
    %v57 = vld [vmem:[%s0 + $0x10] sm:$0xff]
    %v58 = vld [vmem:[%s0 + $0x18] sm:$0xff]
    %v59 = vld [vmem:[%s0 + $0x20] sm:$0xff]
    %v60 = vld [vmem:[%s0 + $0x28] sm:$0xff]
    %v61 = vld [vmem:[%s0 + $0x30] sm:$0xff]
    %v62 = vld [vmem:[%s0 + $0x38] sm:$0xff]
    %v63 = vld [vmem:[%s0 + $0x40] sm:$0xff]
    %v64 = vld [vmem:[%s0 + $0x48] sm:$0xff]
    %v65 = vld [vmem:[%s0 + $0x50] sm:$0xff]
    %v66 = vld [vmem:[%s0 + $0x58] sm:$0xff]
    %v67 = vld [vmem:[%s0 + $0x60] sm:$0xff]
    %v68 = vld [vmem:[%s0 + $0x68] sm:$0xff]
    %v69 = vpack.c.bf16 %v62, %v55
    %v70 = vpack.c.bf16 %v63, %v56
    %v71 = vpack.c.bf16 %v64, %v57
    %v72 = vpack.c.bf16 %v65, %v58
    %v73 = vpack.c.bf16 %v66, %v59
    %v74 = vpack.c.bf16 %v67, %v60
    %v75 = vpack.c.bf16 %v68, %v61
    %v76 = vld [vmem:[#allocation2] sm:$0xff]
    %v77 = vld [vmem:[#allocation2 + $0x8] sm:$0xff]
    %v78 = vld [vmem:[#allocation2 + $0x10] sm:$0xff]
    %v79 = vld [vmem:[#allocation2 + $0x18] sm:$0xff]
    %v80 = vld [vmem:[#allocation2 + $0x20] sm:$0xff]
    %v81 = vld [vmem:[#allocation2 + $0x28] sm:$0xff]
    %v82 = vld [vmem:[#allocation2 + $0x30] sm:$0xff]
    %v83 = vld [vmem:[#allocation2 + $0x38] sm:$0xff]
    %v84 = vld [vmem:[#allocation2 + $0x40] sm:$0xff]
    %v85 = vld [vmem:[#allocation2 + $0x48] sm:$0xff]
    %v86 = vld [vmem:[#allocation2 + $0x50] sm:$0xff]
    %v87 = vld [vmem:[#allocation2 + $0x58] sm:$0xff]
    %v88 = vld [vmem:[#allocation2 + $0x60] sm:$0xff]
    %v89 = vld [vmem:[#allocation2 + $0x68] sm:$0xff]
    %v90 = vld [vmem:[#allocation2 + $0x70] sm:$0xff]
    %v91 = vld [vmem:[#allocation2 + $0x78] sm:$0xff]
    %v92 = vld [vmem:[#allocation2 + $0x80] sm:$0xff]
    %v93 = vld [vmem:[#allocation2 + $0x88] sm:$0xff]
    %v94 = vld [vmem:[#allocation2 + $0x90] sm:$0xff]
    %v95 = vld [vmem:[#allocation2 + $0x98] sm:$0xff]
    %v96 = vld [vmem:[#allocation2 + $0xa0] sm:$0xff]
    %v97 = vld [vmem:[#allocation2 + $0xa8] sm:$0xff]
    %v98 = vld [vmem:[#allocation2 + $0xb0] sm:$0xff]
    %v99 = vld [vmem:[#allocation2 + $0xb8] sm:$0xff]
    %v100 = vld [vmem:[#allocation2 + $0xc0] sm:$0xff]
    %v101 = vld [vmem:[#allocation2 + $0xc8] sm:$0xff]
    %v102 = vld [vmem:[#allocation2 + $0xd0] sm:$0xff]
    %v103 = vld [vmem:[#allocation2 + $0xd8] sm:$0xff]
    %v104 = vld [vmem:[#allocation2 + $0xe0] sm:$0xff]
    %v105 = vld [vmem:[#allocation2 + $0xe8] sm:$0xff]
    %v106 = vld [vmem:[#allocation2 + $0xf0] sm:$0xff]
    %v107 = vld [vmem:[#allocation2 + $0xf8] sm:$0xff]
    %v108 = vld [vmem:[#allocation2 + $0x100] sm:$0xff]
    %v109 = vld [vmem:[#allocation2 + $0x108] sm:$0xff]
    %v110 = vld [vmem:[#allocation2 + $0x110] sm:$0xff]
    %v111 = vld [vmem:[#allocation2 + $0x118] sm:$0xff]
    %v112 = vld [vmem:[#allocation2 + $0x120] sm:$0xff]
    %v113 = vld [vmem:[#allocation2 + $0x128] sm:$0xff]
    %v114 = vld [vmem:[#allocation2 + $0x130] sm:$0xff]
    %v115 = vld [vmem:[#allocation2 + $0x138] sm:$0xff]
    %v116 = vld [vmem:[#allocation2 + $0x140] sm:$0xff]
    %v117 = vld [vmem:[#allocation2 + $0x148] sm:$0xff]
    %v118 = vld [vmem:[#allocation2 + $0x150] sm:$0xff]
    %v119 = vld [vmem:[#allocation2 + $0x158] sm:$0xff]
    %v120 = vld [vmem:[#allocation2 + $0x160] sm:$0xff]
    %v121 = vld [vmem:[#allocation2 + $0x168] sm:$0xff]
    %v122 = vld [vmem:[#allocation2 + $0x170] sm:$0xff]
    %v123 = vld [vmem:[#allocation2 + $0x178] sm:$0xff]
    %v124 = vld [vmem:[#allocation2 + $0x180] sm:$0xff]
    %v125 = vld [vmem:[#allocation2 + $0x188] sm:$0xff]
    %v126 = vld [vmem:[#allocation2 + $0x190] sm:$0xff]
    %v127 = vld [vmem:[#allocation2 + $0x198] sm:$0xff]
    %v128 = vld [vmem:[#allocation2 + $0x1a0] sm:$0xff]
    %v129 = vld [vmem:[#allocation2 + $0x1a8] sm:$0xff]
    %v130 = vld [vmem:[#allocation2 + $0x1b0] sm:$0xff]
    %v131 = vld [vmem:[#allocation2 + $0x1b8] sm:$0xff]
    %v132 = vld [vmem:[#allocation2 + $0x1c0] sm:$0xff]
    %v133 = vld [vmem:[#allocation2 + $0x1c8] sm:$0xff]
    %v134 = vld [vmem:[#allocation2 + $0x1d0] sm:$0xff]
    %v135 = vld [vmem:[#allocation2 + $0x1d8] sm:$0xff]
    %v136 = vld [vmem:[#allocation2 + $0x1e0] sm:$0xff]
    %v137 = vld [vmem:[#allocation2 + $0x1e8] sm:$0xff]
    %v138 = vld [vmem:[#allocation2 + $0x1f0] sm:$0xff]
    %v139 = vld [vmem:[#allocation2 + $0x1f8] sm:$0xff]
    %v140 = vld [vmem:[#allocation2 + $0x200] sm:$0xff]
    %v141 = vld [vmem:[#allocation2 + $0x208] sm:$0xff]
    %v142 = vld [vmem:[#allocation2 + $0x210] sm:$0xff]
    %v143 = vld [vmem:[#allocation2 + $0x218] sm:$0xff]
    %v144 = vld [vmem:[#allocation2 + $0x220] sm:$0xff]
    %v145 = vld [vmem:[#allocation2 + $0x228] sm:$0xff]
    %v146 = vld [vmem:[#allocation2 + $0x230] sm:$0xff]
    %v147 = vld [vmem:[#allocation2 + $0x238] sm:$0xff]
    %v148 = vld [vmem:[#allocation2 + $0x240] sm:$0xff]
    %v149 = vld [vmem:[#allocation2 + $0x248] sm:$0xff]
    %v150 = vld [vmem:[#allocation2 + $0x250] sm:$0xff]
    %v151 = vld [vmem:[#allocation2 + $0x258] sm:$0xff]
    %v152 = vld [vmem:[#allocation2 + $0x260] sm:$0xff]
    %v153 = vld [vmem:[#allocation2 + $0x268] sm:$0xff]
    %v154 = vld [vmem:[#allocation2 + $0x270] sm:$0xff]
    %v155 = vld [vmem:[#allocation2 + $0x278] sm:$0xff]
    %v156 = vld [vmem:[#allocation2 + $0x280] sm:$0xff]
    %v157 = vld [vmem:[#allocation2 + $0x288] sm:$0xff]
    %v158 = vld [vmem:[#allocation2 + $0x290] sm:$0xff]
    %v159 = vld [vmem:[#allocation2 + $0x298] sm:$0xff]
    %v160 = vld [vmem:[#allocation2 + $0x2a0] sm:$0xff]
    %v161 = vld [vmem:[#allocation2 + $0x2a8] sm:$0xff]
    %v162 = vld [vmem:[#allocation2 + $0x2b0] sm:$0xff]
    %v163 = vld [vmem:[#allocation2 + $0x2b8] sm:$0xff]
    %v164 = vld [vmem:[#allocation2 + $0x2c0] sm:$0xff]
    %v165 = vld [vmem:[#allocation2 + $0x2c8] sm:$0xff]
    %v166 = vld [vmem:[#allocation2 + $0x2d0] sm:$0xff]
    %v167 = vld [vmem:[#allocation2 + $0x2d8] sm:$0xff]
    %v168 = vld [vmem:[#allocation2 + $0x2e0] sm:$0xff]
    %v169 = vld [vmem:[#allocation2 + $0x2e8] sm:$0xff]
    %v170 = vld [vmem:[#allocation2 + $0x2f0] sm:$0xff]
    %v171 = vld [vmem:[#allocation2 + $0x2f8] sm:$0xff]
    %v172 = vld [vmem:[#allocation2 + $0x300] sm:$0xff]
    %v173 = vld [vmem:[#allocation2 + $0x308] sm:$0xff]
    %v174 = vld [vmem:[#allocation2 + $0x310] sm:$0xff]
    %v175 = vld [vmem:[#allocation2 + $0x318] sm:$0xff]
    %v176 = vld [vmem:[#allocation2 + $0x320] sm:$0xff]
    %v177 = vld [vmem:[#allocation2 + $0x328] sm:$0xff]
    %v178 = vld [vmem:[#allocation2 + $0x330] sm:$0xff]
    %v179 = vld [vmem:[#allocation2 + $0x338] sm:$0xff]
    %v180 = vld [vmem:[#allocation2 + $0x340] sm:$0xff]
    %v181 = vld [vmem:[#allocation2 + $0x348] sm:$0xff]
    %v182 = vld [vmem:[#allocation2 + $0x350] sm:$0xff]
    %v183 = vld [vmem:[#allocation2 + $0x358] sm:$0xff]
    %v184 = vld [vmem:[#allocation2 + $0x360] sm:$0xff]
    %v185 = vld [vmem:[#allocation2 + $0x368] sm:$0xff]
    %v186 = vld [vmem:[#allocation2 + $0x370] sm:$0xff]
    %v187 = vld [vmem:[#allocation2 + $0x378] sm:$0xff]
    %v188 = vld [vmem:[#allocation2 + $0x380] sm:$0xff]
    %v189 = vld [vmem:[#allocation2 + $0x388] sm:$0xff]
    %v190 = vld [vmem:[#allocation2 + $0x390] sm:$0xff]
    %v191 = vld [vmem:[#allocation2 + $0x398] sm:$0xff]
    %v192 = vld [vmem:[#allocation2 + $0x3a0] sm:$0xff]
    %v193 = vld [vmem:[#allocation2 + $0x3a8] sm:$0xff]
    %v194 = vld [vmem:[#allocation2 + $0x3b0] sm:$0xff]
    %v195 = vld [vmem:[#allocation2 + $0x3b8] sm:$0xff]
    %v196 = vld [vmem:[#allocation2 + $0x3c0] sm:$0xff]
    %v197 = vld [vmem:[#allocation2 + $0x3c8] sm:$0xff]
    %v198 = vld [vmem:[#allocation2 + $0x3d0] sm:$0xff]
    %v199 = vld [vmem:[#allocation2 + $0x3d8] sm:$0xff]
    %v200 = vld [vmem:[#allocation2 + $0x3e0] sm:$0xff]
    %v201 = vld [vmem:[#allocation2 + $0x3e8] sm:$0xff]
    %v202 = vld [vmem:[#allocation2 + $0x3f0] sm:$0xff]
    %v203 = vld [vmem:[#allocation2 + $0x3f8] sm:$0xff]
    %v204 = vld [vmem:[#allocation2 + $0x400] sm:$0xff]
    %v205 = vld [vmem:[#allocation2 + $0x408] sm:$0xff]
    %v206 = vld [vmem:[#allocation2 + $0x410] sm:$0xff]
    %v207 = vld [vmem:[#allocation2 + $0x418] sm:$0xff]
    %v208 = vld [vmem:[#allocation2 + $0x420] sm:$0xff]
    %v209 = vld [vmem:[#allocation2 + $0x428] sm:$0xff]
    %v210 = vld [vmem:[#allocation2 + $0x430] sm:$0xff]
    %v211 = vld [vmem:[#allocation2 + $0x438] sm:$0xff]
    %v212 = vld [vmem:[#allocation2 + $0x440] sm:$0xff]
    %v213 = vld [vmem:[#allocation2 + $0x448] sm:$0xff]
    %v214 = vld [vmem:[#allocation2 + $0x450] sm:$0xff]
    %v215 = vld [vmem:[#allocation2 + $0x458] sm:$0xff]
    %v216 = vld [vmem:[#allocation2 + $0x460] sm:$0xff]
    %v217 = vld [vmem:[#allocation2 + $0x468] sm:$0xff]
    %v218 = vld [vmem:[#allocation2 + $0x470] sm:$0xff]
    %v219 = vld [vmem:[#allocation2 + $0x478] sm:$0xff]
    %v220 = vld [vmem:[#allocation2 + $0x480] sm:$0xff]
    %v221 = vld [vmem:[#allocation2 + $0x488] sm:$0xff]
    %v222 = vld [vmem:[#allocation2 + $0x490] sm:$0xff]
    %v223 = vld [vmem:[#allocation2 + $0x498] sm:$0xff]
    %v224 = vld [vmem:[#allocation2 + $0x4a0] sm:$0xff]
    %v225 = vld [vmem:[#allocation2 + $0x4a8] sm:$0xff]
    %v226 = vld [vmem:[#allocation2 + $0x4b0] sm:$0xff]
    %v227 = vld [vmem:[#allocation2 + $0x4b8] sm:$0xff]
    %v228 = vld [vmem:[#allocation2 + $0x4c0] sm:$0xff]
    %v229 = vld [vmem:[#allocation2 + $0x4c8] sm:$0xff]
    %v230 = vld [vmem:[#allocation2 + $0x4d0] sm:$0xff]
    %v231 = vld [vmem:[#allocation2 + $0x4d8] sm:$0xff]
    %v232 = vld [vmem:[#allocation2 + $0x4e0] sm:$0xff]
    %v233 = vld [vmem:[#allocation2 + $0x4e8] sm:$0xff]
    %v234 = vld [vmem:[#allocation2 + $0x4f0] sm:$0xff]
    %v235 = vld [vmem:[#allocation2 + $0x4f8] sm:$0xff]
    %v236 = vld [vmem:[#allocation2 + $0x500] sm:$0xff]
    %v237 = vld [vmem:[#allocation2 + $0x508] sm:$0xff]
    %v238 = vld [vmem:[#allocation2 + $0x510] sm:$0xff]
    %v239 = vld [vmem:[#allocation2 + $0x518] sm:$0xff]
    %v240 = vld [vmem:[#allocation2 + $0x520] sm:$0xff]
    %v241 = vld [vmem:[#allocation2 + $0x528] sm:$0xff]
    %v242 = vld [vmem:[#allocation2 + $0x530] sm:$0xff]
    %v243 = vld [vmem:[#allocation2 + $0x538] sm:$0xff]
    %v244 = vld [vmem:[#allocation2 + $0x540] sm:$0xff]
    %v245 = vld [vmem:[#allocation2 + $0x548] sm:$0xff]
    %v246 = vld [vmem:[#allocation2 + $0x550] sm:$0xff]
    %v247 = vld [vmem:[#allocation2 + $0x558] sm:$0xff]
    %v248 = vld [vmem:[#allocation2 + $0x560] sm:$0xff]
    %v249 = vld [vmem:[#allocation2 + $0x568] sm:$0xff]
    %v250 = vld [vmem:[#allocation2 + $0x570] sm:$0xff]
    %v251 = vld [vmem:[#allocation2 + $0x578] sm:$0xff]
    %v252 = vld [vmem:[#allocation2 + $0x580] sm:$0xff]
    %v253 = vld [vmem:[#allocation2 + $0x588] sm:$0xff]
    %v254 = vld [vmem:[#allocation2 + $0x590] sm:$0xff]
    %v255 = vld [vmem:[#allocation2 + $0x598] sm:$0xff]
    %v256 = vld [vmem:[#allocation2 + $0x5a0] sm:$0xff]
    %v257 = vld [vmem:[#allocation2 + $0x5a8] sm:$0xff]
    %v258 = vld [vmem:[#allocation2 + $0x5b0] sm:$0xff]
    %v259 = vld [vmem:[#allocation2 + $0x5b8] sm:$0xff]
    %v260 = vld [vmem:[#allocation2 + $0x5c0] sm:$0xff]
    %v261 = vld [vmem:[#allocation2 + $0x5c8] sm:$0xff]
    %v262 = vld [vmem:[#allocation2 + $0x5d0] sm:$0xff]
    %v263 = vld [vmem:[#allocation2 + $0x5d8] sm:$0xff]
    %v264 = vld [vmem:[#allocation2 + $0x5e0] sm:$0xff]
    %v265 = vld [vmem:[#allocation2 + $0x5e8] sm:$0xff]
    %v266 = vld [vmem:[#allocation2 + $0x5f0] sm:$0xff]
    %v267 = vld [vmem:[#allocation2 + $0x5f8] sm:$0xff]
    %v268 = vld [vmem:[#allocation2 + $0x600] sm:$0xff]
    %v269 = vld [vmem:[#allocation2 + $0x608] sm:$0xff]
    %v270 = vld [vmem:[#allocation2 + $0x610] sm:$0xff]
    %v271 = vld [vmem:[#allocation2 + $0x618] sm:$0xff]
    %v272 = vld [vmem:[%s2] sm:$0xf]
    %v274 = vperm.slane %v272, 0
    %v275 = vperm.slane %v272, 1
    %v276 = vperm.slane %v272, 2
    %v277 = vperm.slane %v272, 3
    %v478 = vunpack.c.l.b16 %v76
    %v479 = vunpack.c.h.b16 %v76
    %v480 = vunpack.c.l.b16 %v77
    %v481 = vunpack.c.h.b16 %v77
    %v482 = vunpack.c.l.b16 %v78
    %v483 = vunpack.c.h.b16 %v78
    %v484 = vunpack.c.l.b16 %v79
    %v485 = vunpack.c.h.b16 %v79
    %v486 = vunpack.c.l.b16 %v80
    %v487 = vunpack.c.h.b16 %v80
    %v488 = vunpack.c.l.b16 %v81
    %v489 = vunpack.c.h.b16 %v81
    %v490 = vunpack.c.l.b16 %v82
    %v491 = vunpack.c.h.b16 %v82
    %v492 = vunpack.c.l.b16 %v83
    %v493 = vunpack.c.h.b16 %v83
    %v494 = vunpack.c.l.b16 %v84
    %v495 = vunpack.c.h.b16 %v84
    %v496 = vunpack.c.l.b16 %v85
    %v497 = vunpack.c.h.b16 %v85
    %v498 = vunpack.c.l.b16 %v86
    %v499 = vunpack.c.h.b16 %v86
    %v500 = vunpack.c.l.b16 %v87
    %v501 = vunpack.c.h.b16 %v87
    %v502 = vunpack.c.l.b16 %v88
    %v503 = vunpack.c.h.b16 %v88
    %v504 = vunpack.c.l.b16 %v89
    %v505 = vunpack.c.h.b16 %v89
    %v506 = vunpack.c.l.b16 %v90
    %v507 = vunpack.c.h.b16 %v90
    %v508 = vunpack.c.l.b16 %v91
    %v509 = vunpack.c.h.b16 %v91
    %v510 = vunpack.c.l.b16 %v92
    %v511 = vunpack.c.h.b16 %v92
    %v512 = vunpack.c.l.b16 %v93
    %v513 = vunpack.c.h.b16 %v93
    %v514 = vunpack.c.l.b16 %v94
    %v515 = vunpack.c.h.b16 %v94
    %v516 = vunpack.c.l.b16 %v95
    %v517 = vunpack.c.h.b16 %v95
    %v518 = vunpack.c.l.b16 %v96
    %v519 = vunpack.c.h.b16 %v96
    %v520 = vunpack.c.l.b16 %v97
    %v521 = vunpack.c.h.b16 %v97
    %v522 = vunpack.c.l.b16 %v98
    %v523 = vunpack.c.h.b16 %v98
    %v524 = vunpack.c.l.b16 %v99
    %v525 = vunpack.c.h.b16 %v99
    %v526 = vunpack.c.l.b16 %v100
    %v527 = vunpack.c.h.b16 %v100
    %v528 = vunpack.c.l.b16 %v101
    %v529 = vunpack.c.h.b16 %v101
    %v530 = vunpack.c.l.b16 %v102
    %v531 = vunpack.c.h.b16 %v102
    %v532 = vunpack.c.l.b16 %v103
    %v533 = vunpack.c.h.b16 %v103
    %v534 = vunpack.c.l.b16 %v104
    %v535 = vunpack.c.h.b16 %v104
    %v536 = vunpack.c.l.b16 %v105
    %v537 = vunpack.c.h.b16 %v105
    %v538 = vunpack.c.l.b16 %v106
    %v539 = vunpack.c.h.b16 %v106
    %v540 = vunpack.c.l.b16 %v107
    %v541 = vunpack.c.h.b16 %v107
    %v542 = vunpack.c.l.b16 %v108
    %v543 = vunpack.c.h.b16 %v108
    %v544 = vunpack.c.l.b16 %v109
    %v545 = vunpack.c.h.b16 %v109
    %v546 = vunpack.c.l.b16 %v110
    %v547 = vunpack.c.h.b16 %v110
    %v548 = vunpack.c.l.b16 %v111
    %v549 = vunpack.c.h.b16 %v111
    %v550 = vunpack.c.l.b16 %v112
    %v551 = vunpack.c.h.b16 %v112
    %v552 = vunpack.c.l.b16 %v113
    %v553 = vunpack.c.h.b16 %v113
    %v554 = vunpack.c.l.b16 %v114
    %v555 = vunpack.c.h.b16 %v114
    %v556 = vunpack.c.l.b16 %v115
    %v557 = vunpack.c.h.b16 %v115
    %v558 = vunpack.c.l.b16 %v116
    %v559 = vunpack.c.h.b16 %v116
    %v560 = vunpack.c.l.b16 %v117
    %v561 = vunpack.c.h.b16 %v117
    %v562 = vunpack.c.l.b16 %v118
    %v563 = vunpack.c.h.b16 %v118
    %v564 = vunpack.c.l.b16 %v119
    %v565 = vunpack.c.h.b16 %v119
    %v566 = vunpack.c.l.b16 %v120
    %v567 = vunpack.c.h.b16 %v120
    %v568 = vunpack.c.l.b16 %v121
    %v569 = vunpack.c.h.b16 %v121
    %v570 = vunpack.c.l.b16 %v122
    %v571 = vunpack.c.h.b16 %v122
    %v572 = vunpack.c.l.b16 %v123
    %v573 = vunpack.c.h.b16 %v123
    %v574 = vunpack.c.l.b16 %v124
    %v575 = vunpack.c.h.b16 %v124
    %v576 = vunpack.c.l.b16 %v125
    %v577 = vunpack.c.h.b16 %v125
    %v578 = vunpack.c.l.b16 %v126
    %v579 = vunpack.c.h.b16 %v126
    %v580 = vunpack.c.l.b16 %v127
    %v581 = vunpack.c.h.b16 %v127
    %v582 = vunpack.c.l.b16 %v128
    %v583 = vunpack.c.h.b16 %v128
    %v584 = vunpack.c.l.b16 %v129
    %v585 = vunpack.c.h.b16 %v129
    %v586 = vunpack.c.l.b16 %v130
    %v587 = vunpack.c.h.b16 %v130
    %v588 = vunpack.c.l.b16 %v131
    %v589 = vunpack.c.h.b16 %v131
    %v590 = vunpack.c.l.b16 %v132
    %v591 = vunpack.c.h.b16 %v132
    %v592 = vunpack.c.l.b16 %v133
    %v593 = vunpack.c.h.b16 %v133
    %v594 = vunpack.c.l.b16 %v134
    %v595 = vunpack.c.h.b16 %v134
    %v596 = vunpack.c.l.b16 %v135
    %v597 = vunpack.c.h.b16 %v135
    %v598 = vunpack.c.l.b16 %v136
    %v599 = vunpack.c.h.b16 %v136
    %v600 = vunpack.c.l.b16 %v137
    %v601 = vunpack.c.h.b16 %v137
    %v602 = vunpack.c.l.b16 %v138
    %v603 = vunpack.c.h.b16 %v138
    %v604 = vunpack.c.l.b16 %v139
    %v605 = vunpack.c.h.b16 %v139
    %v606 = vunpack.c.l.b16 %v140
    %v607 = vunpack.c.h.b16 %v140
    %v608 = vunpack.c.l.b16 %v141
    %v609 = vunpack.c.h.b16 %v141
    %v610 = vunpack.c.l.b16 %v142
    %v611 = vunpack.c.h.b16 %v142
    %v612 = vunpack.c.l.b16 %v143
    %v613 = vunpack.c.h.b16 %v143
    %v614 = vunpack.c.l.b16 %v144
    %v615 = vunpack.c.h.b16 %v144
    %v616 = vunpack.c.l.b16 %v145
    %v617 = vunpack.c.h.b16 %v145
    %v618 = vunpack.c.l.b16 %v146
    %v619 = vunpack.c.h.b16 %v146
    %v620 = vunpack.c.l.b16 %v147
    %v621 = vunpack.c.h.b16 %v147
    %v622 = vunpack.c.l.b16 %v148
    %v623 = vunpack.c.h.b16 %v148
    %v624 = vunpack.c.l.b16 %v149
    %v625 = vunpack.c.h.b16 %v149
    %v626 = vunpack.c.l.b16 %v150
    %v627 = vunpack.c.h.b16 %v150
    %v628 = vunpack.c.l.b16 %v151
    %v629 = vunpack.c.h.b16 %v151
    %v630 = vunpack.c.l.b16 %v152
    %v631 = vunpack.c.h.b16 %v152
    %v632 = vunpack.c.l.b16 %v153
    %v633 = vunpack.c.h.b16 %v153
    %v634 = vunpack.c.l.b16 %v154
    %v635 = vunpack.c.h.b16 %v154
    %v636 = vunpack.c.l.b16 %v155
    %v637 = vunpack.c.h.b16 %v155
    %v638 = vunpack.c.l.b16 %v156
    %v639 = vunpack.c.h.b16 %v156
    %v640 = vunpack.c.l.b16 %v157
    %v641 = vunpack.c.h.b16 %v157
    %v642 = vunpack.c.l.b16 %v158
    %v643 = vunpack.c.h.b16 %v158
    %v644 = vunpack.c.l.b16 %v159
    %v645 = vunpack.c.h.b16 %v159
    %v646 = vunpack.c.l.b16 %v160
    %v647 = vunpack.c.h.b16 %v160
    %v648 = vunpack.c.l.b16 %v161
    %v649 = vunpack.c.h.b16 %v161
    %v650 = vunpack.c.l.b16 %v162
    %v651 = vunpack.c.h.b16 %v162
    %v652 = vunpack.c.l.b16 %v163
    %v653 = vunpack.c.h.b16 %v163
    %v654 = vunpack.c.l.b16 %v164
    %v655 = vunpack.c.h.b16 %v164
    %v656 = vunpack.c.l.b16 %v165
    %v657 = vunpack.c.h.b16 %v165
    %v658 = vunpack.c.l.b16 %v166
    %v659 = vunpack.c.h.b16 %v166
    %v660 = vunpack.c.l.b16 %v167
    %v661 = vunpack.c.h.b16 %v167
    %v662 = vunpack.c.l.b16 %v168
    %v663 = vunpack.c.h.b16 %v168
    %v664 = vunpack.c.l.b16 %v169
    %v665 = vunpack.c.h.b16 %v169
    %v666 = vunpack.c.l.b16 %v170
    %v667 = vunpack.c.h.b16 %v170
    %v668 = vunpack.c.l.b16 %v171
    %v669 = vunpack.c.h.b16 %v171
    %v670 = vunpack.c.l.b16 %v172
    %v671 = vunpack.c.h.b16 %v172
    %v672 = vunpack.c.l.b16 %v173
    %v673 = vunpack.c.h.b16 %v173
    %v674 = vunpack.c.l.b16 %v174
    %v675 = vunpack.c.h.b16 %v174
    %v676 = vunpack.c.l.b16 %v175
    %v677 = vunpack.c.h.b16 %v175
    %v678 = vunpack.c.l.b16 %v176
    %v679 = vunpack.c.h.b16 %v176
    %v680 = vunpack.c.l.b16 %v177
    %v681 = vunpack.c.h.b16 %v177
    %v682 = vunpack.c.l.b16 %v178
    %v683 = vunpack.c.h.b16 %v178
    %v684 = vunpack.c.l.b16 %v179
    %v685 = vunpack.c.h.b16 %v179
    %v686 = vunpack.c.l.b16 %v180
    %v687 = vunpack.c.h.b16 %v180
    %v688 = vunpack.c.l.b16 %v181
    %v689 = vunpack.c.h.b16 %v181
    %v690 = vunpack.c.l.b16 %v182
    %v691 = vunpack.c.h.b16 %v182
    %v692 = vunpack.c.l.b16 %v183
    %v693 = vunpack.c.h.b16 %v183
    %v694 = vunpack.c.l.b16 %v184
    %v695 = vunpack.c.h.b16 %v184
    %v696 = vunpack.c.l.b16 %v185
    %v697 = vunpack.c.h.b16 %v185
    %v698 = vunpack.c.l.b16 %v186
    %v699 = vunpack.c.h.b16 %v186
    %v700 = vunpack.c.l.b16 %v187
    %v701 = vunpack.c.h.b16 %v187
    %v702 = vunpack.c.l.b16 %v188
    %v703 = vunpack.c.h.b16 %v188
    %v704 = vunpack.c.l.b16 %v189
    %v705 = vunpack.c.h.b16 %v189
    %v706 = vunpack.c.l.b16 %v190
    %v707 = vunpack.c.h.b16 %v190
    %v708 = vunpack.c.l.b16 %v191
    %v709 = vunpack.c.h.b16 %v191
    %v710 = vunpack.c.l.b16 %v192
    %v711 = vunpack.c.h.b16 %v192
    %v712 = vunpack.c.l.b16 %v193
    %v713 = vunpack.c.h.b16 %v193
    %v714 = vunpack.c.l.b16 %v194
    %v715 = vunpack.c.h.b16 %v194
    %v716 = vunpack.c.l.b16 %v195
    %v717 = vunpack.c.h.b16 %v195
    %v718 = vunpack.c.l.b16 %v196
    %v719 = vunpack.c.h.b16 %v196
    %v720 = vunpack.c.l.b16 %v197
    %v721 = vunpack.c.h.b16 %v197
    %v722 = vunpack.c.l.b16 %v198
    %v723 = vunpack.c.h.b16 %v198
    %v724 = vunpack.c.l.b16 %v199
    %v725 = vunpack.c.h.b16 %v199
    %v726 = vunpack.c.l.b16 %v200
    %v727 = vunpack.c.h.b16 %v200
    %v728 = vunpack.c.l.b16 %v201
    %v729 = vunpack.c.h.b16 %v201
    %v730 = vunpack.c.l.b16 %v202
    %v731 = vunpack.c.h.b16 %v202
    %v732 = vunpack.c.l.b16 %v203
    %v733 = vunpack.c.h.b16 %v203
    %v734 = vunpack.c.l.b16 %v204
    %v735 = vunpack.c.h.b16 %v204
    %v736 = vunpack.c.l.b16 %v205
    %v737 = vunpack.c.h.b16 %v205
    %v738 = vunpack.c.l.b16 %v206
    %v739 = vunpack.c.h.b16 %v206
    %v740 = vunpack.c.l.b16 %v207
    %v741 = vunpack.c.h.b16 %v207
    %v742 = vunpack.c.l.b16 %v208
    %v743 = vunpack.c.h.b16 %v208
    %v744 = vunpack.c.l.b16 %v209
    %v745 = vunpack.c.h.b16 %v209
    %v746 = vunpack.c.l.b16 %v210
    %v747 = vunpack.c.h.b16 %v210
    %v748 = vunpack.c.l.b16 %v211
    %v749 = vunpack.c.h.b16 %v211
    %v750 = vunpack.c.l.b16 %v212
    %v751 = vunpack.c.h.b16 %v212
    %v752 = vunpack.c.l.b16 %v213
    %v753 = vunpack.c.h.b16 %v213
    %v754 = vunpack.c.l.b16 %v214
    %v755 = vunpack.c.h.b16 %v214
    %v756 = vunpack.c.l.b16 %v215
    %v757 = vunpack.c.h.b16 %v215
    %v758 = vunpack.c.l.b16 %v216
    %v759 = vunpack.c.h.b16 %v216
    %v760 = vunpack.c.l.b16 %v217
    %v761 = vunpack.c.h.b16 %v217
    %v762 = vunpack.c.l.b16 %v218
    %v763 = vunpack.c.h.b16 %v218
    %v764 = vunpack.c.l.b16 %v219
    %v765 = vunpack.c.h.b16 %v219
    %v766 = vunpack.c.l.b16 %v220
    %v767 = vunpack.c.h.b16 %v220
    %v768 = vunpack.c.l.b16 %v221
    %v769 = vunpack.c.h.b16 %v221
    %v770 = vunpack.c.l.b16 %v222
    %v771 = vunpack.c.h.b16 %v222
    %v772 = vunpack.c.l.b16 %v223
    %v773 = vunpack.c.h.b16 %v223
    %v774 = vunpack.c.l.b16 %v224
    %v775 = vunpack.c.h.b16 %v224
    %v776 = vunpack.c.l.b16 %v225
    %v777 = vunpack.c.h.b16 %v225
    %v778 = vunpack.c.l.b16 %v226
    %v779 = vunpack.c.h.b16 %v226
    %v780 = vunpack.c.l.b16 %v227
    %v781 = vunpack.c.h.b16 %v227
    %v782 = vunpack.c.l.b16 %v228
    %v783 = vunpack.c.h.b16 %v228
    %v784 = vunpack.c.l.b16 %v229
    %v785 = vunpack.c.h.b16 %v229
    %v786 = vunpack.c.l.b16 %v230
    %v787 = vunpack.c.h.b16 %v230
    %v788 = vunpack.c.l.b16 %v231
    %v789 = vunpack.c.h.b16 %v231
    %v790 = vunpack.c.l.b16 %v232
    %v791 = vunpack.c.h.b16 %v232
    %v792 = vunpack.c.l.b16 %v233
    %v793 = vunpack.c.h.b16 %v233
    %v794 = vunpack.c.l.b16 %v234
    %v795 = vunpack.c.h.b16 %v234
    %v796 = vunpack.c.l.b16 %v235
    %v797 = vunpack.c.h.b16 %v235
    %v798 = vunpack.c.l.b16 %v236
    %v799 = vunpack.c.h.b16 %v236
    %v800 = vunpack.c.l.b16 %v237
    %v801 = vunpack.c.h.b16 %v237
    %v802 = vunpack.c.l.b16 %v238
    %v803 = vunpack.c.h.b16 %v238
    %v804 = vunpack.c.l.b16 %v239
    %v805 = vunpack.c.h.b16 %v239
    %v806 = vunpack.c.l.b16 %v240
    %v807 = vunpack.c.h.b16 %v240
    %v808 = vunpack.c.l.b16 %v241
    %v809 = vunpack.c.h.b16 %v241
    %v810 = vunpack.c.l.b16 %v242
    %v811 = vunpack.c.h.b16 %v242
    %v812 = vunpack.c.l.b16 %v243
    %v813 = vunpack.c.h.b16 %v243
    %v814 = vunpack.c.l.b16 %v244
    %v815 = vunpack.c.h.b16 %v244
    %v816 = vunpack.c.l.b16 %v245
    %v817 = vunpack.c.h.b16 %v245
    %v818 = vunpack.c.l.b16 %v246
    %v819 = vunpack.c.h.b16 %v246
    %v820 = vunpack.c.l.b16 %v247
    %v821 = vunpack.c.h.b16 %v247
    %v822 = vunpack.c.l.b16 %v248
    %v823 = vunpack.c.h.b16 %v248
    %v824 = vunpack.c.l.b16 %v249
    %v825 = vunpack.c.h.b16 %v249
    %v826 = vunpack.c.l.b16 %v250
    %v827 = vunpack.c.h.b16 %v250
    %v828 = vunpack.c.l.b16 %v251
    %v829 = vunpack.c.h.b16 %v251
    %v830 = vunpack.c.l.b16 %v252
    %v831 = vunpack.c.h.b16 %v252
    %v832 = vunpack.c.l.b16 %v253
    %v833 = vunpack.c.h.b16 %v253
    %v834 = vunpack.c.l.b16 %v254
    %v835 = vunpack.c.h.b16 %v254
    %v836 = vunpack.c.l.b16 %v255
    %v837 = vunpack.c.h.b16 %v255
    %v838 = vunpack.c.l.b16 %v256
    %v839 = vunpack.c.h.b16 %v256
    %v840 = vunpack.c.l.b16 %v257
    %v841 = vunpack.c.h.b16 %v257
    %v842 = vunpack.c.l.b16 %v258
    %v843 = vunpack.c.h.b16 %v258
    %v844 = vunpack.c.l.b16 %v259
    %v845 = vunpack.c.h.b16 %v259
    %v846 = vunpack.c.l.b16 %v260
    %v847 = vunpack.c.h.b16 %v260
    %v848 = vunpack.c.l.b16 %v261
    %v849 = vunpack.c.h.b16 %v261
    %v850 = vunpack.c.l.b16 %v262
    %v851 = vunpack.c.h.b16 %v262
    %v852 = vunpack.c.l.b16 %v263
    %v853 = vunpack.c.h.b16 %v263
    %v854 = vunpack.c.l.b16 %v264
    %v855 = vunpack.c.h.b16 %v264
    %v856 = vunpack.c.l.b16 %v265
    %v857 = vunpack.c.h.b16 %v265
    %v858 = vunpack.c.l.b16 %v266
    %v859 = vunpack.c.h.b16 %v266
    %v860 = vunpack.c.l.b16 %v267
    %v861 = vunpack.c.h.b16 %v267
    %v862 = vunpack.c.l.b16 %v268
    %v863 = vunpack.c.h.b16 %v268
    %v864 = vunpack.c.l.b16 %v269
    %v865 = vunpack.c.h.b16 %v269
    %v866 = vunpack.c.l.b16 %v270
    %v867 = vunpack.c.h.b16 %v270
    %v868 = vunpack.c.l.b16 %v271
    %v869 = vunpack.c.h.b16 %v271
    %v870 = vpack.c.b16 %v482, %v478
    %v871 = vpack.c.b16 %v483, %v479
    %v872 = vpack.c.b16 %v484, %v480
    %v873 = vpack.c.b16 %v485, %v481
    %v874 = vpack.c.b16 %v490, %v486
    %v875 = vpack.c.b16 %v491, %v487
    %v876 = vpack.c.b16 %v492, %v488
    %v877 = vpack.c.b16 %v493, %v489
    %v878 = vpack.c.b16 %v498, %v494
    %v879 = vpack.c.b16 %v499, %v495
    %v880 = vpack.c.b16 %v500, %v496
    %v881 = vpack.c.b16 %v501, %v497
    %v882 = vpack.c.b16 %v506, %v502
    %v883 = vpack.c.b16 %v507, %v503
    %v884 = vpack.c.b16 %v508, %v504
    %v885 = vpack.c.b16 %v509, %v505
    %v886 = vpack.c.b16 %v514, %v510
    %v887 = vpack.c.b16 %v515, %v511
    %v888 = vpack.c.b16 %v516, %v512
    %v889 = vpack.c.b16 %v517, %v513
    %v890 = vpack.c.b16 %v522, %v518
    %v891 = vpack.c.b16 %v523, %v519
    %v892 = vpack.c.b16 %v524, %v520
    %v893 = vpack.c.b16 %v525, %v521
    %v894 = vpack.c.b16 %v530, %v526
    %v895 = vpack.c.b16 %v531, %v527
    %v896 = vpack.c.b16 %v532, %v528
    %v897 = vpack.c.b16 %v533, %v529
    %v898 = vpack.c.b16 %v538, %v534
    %v899 = vpack.c.b16 %v539, %v535
    %v900 = vpack.c.b16 %v540, %v536
    %v901 = vpack.c.b16 %v541, %v537
    %v902 = vpack.c.b16 %v546, %v542
    %v903 = vpack.c.b16 %v547, %v543
    %v904 = vpack.c.b16 %v548, %v544
    %v905 = vpack.c.b16 %v549, %v545
    %v906 = vpack.c.b16 %v554, %v550
    %v907 = vpack.c.b16 %v555, %v551
    %v908 = vpack.c.b16 %v556, %v552
    %v909 = vpack.c.b16 %v557, %v553
    %v910 = vpack.c.b16 %v562, %v558
    %v911 = vpack.c.b16 %v563, %v559
    %v912 = vpack.c.b16 %v564, %v560
    %v913 = vpack.c.b16 %v565, %v561
    %v914 = vpack.c.b16 %v570, %v566
    %v915 = vpack.c.b16 %v571, %v567
    %v916 = vpack.c.b16 %v572, %v568
    %v917 = vpack.c.b16 %v573, %v569
    %v918 = vpack.c.b16 %v578, %v574
    %v919 = vpack.c.b16 %v579, %v575
    %v920 = vpack.c.b16 %v580, %v576
    %v921 = vpack.c.b16 %v581, %v577
    %v922 = vpack.c.b16 %v586, %v582
    %v923 = vpack.c.b16 %v587, %v583
    %v924 = vpack.c.b16 %v588, %v584
    %v925 = vpack.c.b16 %v589, %v585
    %v926 = vpack.c.b16 %v594, %v590
    %v927 = vpack.c.b16 %v595, %v591
    %v928 = vpack.c.b16 %v596, %v592
    %v929 = vpack.c.b16 %v597, %v593
    %v930 = vpack.c.b16 %v602, %v598
    %v931 = vpack.c.b16 %v603, %v599
    %v932 = vpack.c.b16 %v604, %v600
    %v933 = vpack.c.b16 %v605, %v601
    %v934 = vpack.c.b16 %v610, %v606
    %v935 = vpack.c.b16 %v611, %v607
    %v936 = vpack.c.b16 %v612, %v608
    %v937 = vpack.c.b16 %v613, %v609
    %v938 = vpack.c.b16 %v618, %v614
    %v939 = vpack.c.b16 %v619, %v615
    %v940 = vpack.c.b16 %v620, %v616
    %v941 = vpack.c.b16 %v621, %v617
    %v942 = vpack.c.b16 %v626, %v622
    %v943 = vpack.c.b16 %v627, %v623
    %v944 = vpack.c.b16 %v628, %v624
    %v945 = vpack.c.b16 %v629, %v625
    %v946 = vpack.c.b16 %v634, %v630
    %v947 = vpack.c.b16 %v635, %v631
    %v948 = vpack.c.b16 %v636, %v632
    %v949 = vpack.c.b16 %v637, %v633
    %v950 = vpack.c.b16 %v642, %v638
    %v951 = vpack.c.b16 %v643, %v639
    %v952 = vpack.c.b16 %v644, %v640
    %v953 = vpack.c.b16 %v645, %v641
    %v954 = vpack.c.b16 %v650, %v646
    %v955 = vpack.c.b16 %v651, %v647
    %v956 = vpack.c.b16 %v652, %v648
    %v957 = vpack.c.b16 %v653, %v649
    %v958 = vpack.c.b16 %v658, %v654
    %v959 = vpack.c.b16 %v659, %v655
    %v960 = vpack.c.b16 %v660, %v656
    %v961 = vpack.c.b16 %v661, %v657
    %v962 = vpack.c.b16 %v666, %v662
    %v963 = vpack.c.b16 %v667, %v663
    %v964 = vpack.c.b16 %v668, %v664
    %v965 = vpack.c.b16 %v669, %v665
    %v966 = vpack.c.b16 %v674, %v670
    %v967 = vpack.c.b16 %v675, %v671
    %v968 = vpack.c.b16 %v676, %v672
    %v969 = vpack.c.b16 %v677, %v673
    %v970 = vpack.c.b16 %v682, %v678
    %v971 = vpack.c.b16 %v683, %v679
    %v972 = vpack.c.b16 %v684, %v680
    %v973 = vpack.c.b16 %v685, %v681
    %v974 = vpack.c.b16 %v690, %v686
    %v975 = vpack.c.b16 %v691, %v687
    %v976 = vpack.c.b16 %v692, %v688
    %v977 = vpack.c.b16 %v693, %v689
    %v978 = vpack.c.b16 %v698, %v694
    %v979 = vpack.c.b16 %v699, %v695
    %v980 = vpack.c.b16 %v700, %v696
    %v981 = vpack.c.b16 %v701, %v697
    %v982 = vpack.c.b16 %v706, %v702
    %v983 = vpack.c.b16 %v707, %v703
    %v984 = vpack.c.b16 %v708, %v704
    %v985 = vpack.c.b16 %v709, %v705
    %v986 = vpack.c.b16 %v714, %v710
    %v987 = vpack.c.b16 %v715, %v711
    %v988 = vpack.c.b16 %v716, %v712
    %v989 = vpack.c.b16 %v717, %v713
    %v990 = vpack.c.b16 %v722, %v718
    %v991 = vpack.c.b16 %v723, %v719
    %v992 = vpack.c.b16 %v724, %v720
    %v993 = vpack.c.b16 %v725, %v721
    %v994 = vpack.c.b16 %v730, %v726
    %v995 = vpack.c.b16 %v731, %v727
    %v996 = vpack.c.b16 %v732, %v728
    %v997 = vpack.c.b16 %v733, %v729
    %v998 = vpack.c.b16 %v738, %v734
    %v999 = vpack.c.b16 %v739, %v735
    %v1000 = vpack.c.b16 %v740, %v736
    %v1001 = vpack.c.b16 %v741, %v737
    %v1002 = vpack.c.b16 %v746, %v742
    %v1003 = vpack.c.b16 %v747, %v743
    %v1004 = vpack.c.b16 %v748, %v744
    %v1005 = vpack.c.b16 %v749, %v745
    %v1006 = vpack.c.b16 %v754, %v750
    %v1007 = vpack.c.b16 %v755, %v751
    %v1008 = vpack.c.b16 %v756, %v752
    %v1009 = vpack.c.b16 %v757, %v753
    %v1010 = vpack.c.b16 %v762, %v758
    %v1011 = vpack.c.b16 %v763, %v759
    %v1012 = vpack.c.b16 %v764, %v760
    %v1013 = vpack.c.b16 %v765, %v761
    %v1014 = vpack.c.b16 %v770, %v766
    %v1015 = vpack.c.b16 %v771, %v767
    %v1016 = vpack.c.b16 %v772, %v768
    %v1017 = vpack.c.b16 %v773, %v769
    %v1018 = vpack.c.b16 %v778, %v774
    %v1019 = vpack.c.b16 %v779, %v775
    %v1020 = vpack.c.b16 %v780, %v776
    %v1021 = vpack.c.b16 %v781, %v777
    %v1022 = vpack.c.b16 %v786, %v782
    %v1023 = vpack.c.b16 %v787, %v783
    %v1024 = vpack.c.b16 %v788, %v784
    %v1025 = vpack.c.b16 %v789, %v785
    %v1026 = vpack.c.b16 %v794, %v790
    %v1027 = vpack.c.b16 %v795, %v791
    %v1028 = vpack.c.b16 %v796, %v792
    %v1029 = vpack.c.b16 %v797, %v793
    %v1030 = vpack.c.b16 %v802, %v798
    %v1031 = vpack.c.b16 %v803, %v799
    %v1032 = vpack.c.b16 %v804, %v800
    %v1033 = vpack.c.b16 %v805, %v801
    %v1034 = vpack.c.b16 %v810, %v806
    %v1035 = vpack.c.b16 %v811, %v807
    %v1036 = vpack.c.b16 %v812, %v808
    %v1037 = vpack.c.b16 %v813, %v809
    %v1038 = vpack.c.b16 %v818, %v814
    %v1039 = vpack.c.b16 %v819, %v815
    %v1040 = vpack.c.b16 %v820, %v816
    %v1041 = vpack.c.b16 %v821, %v817
    %v1042 = vpack.c.b16 %v826, %v822
    %v1043 = vpack.c.b16 %v827, %v823
    %v1044 = vpack.c.b16 %v828, %v824
    %v1045 = vpack.c.b16 %v829, %v825
    %v1046 = vpack.c.b16 %v834, %v830
    %v1047 = vpack.c.b16 %v835, %v831
    %v1048 = vpack.c.b16 %v836, %v832
    %v1049 = vpack.c.b16 %v837, %v833
    %v1050 = vpack.c.b16 %v842, %v838
    %v1051 = vpack.c.b16 %v843, %v839
    %v1052 = vpack.c.b16 %v844, %v840
    %v1053 = vpack.c.b16 %v845, %v841
    %v1054 = vpack.c.b16 %v850, %v846
    %v1055 = vpack.c.b16 %v851, %v847
    %v1056 = vpack.c.b16 %v852, %v848
    %v1057 = vpack.c.b16 %v853, %v849
    %v1058 = vpack.c.b16 %v858, %v854
    %v1059 = vpack.c.b16 %v859, %v855
    %v1060 = vpack.c.b16 %v860, %v856
    %v1061 = vpack.c.b16 %v861, %v857
    %v1062 = vpack.c.b16 %v866, %v862
    %v1063 = vpack.c.b16 %v867, %v863
    %v1064 = vpack.c.b16 %v868, %v864
    %v1065 = vpack.c.b16 %v869, %v865
    %vm1262 = vcmask 130048
    %v1264 = vsel %vm1262, %v75, 0
    %1266 = vmatpush.bf16.msra.mxu0 %v898
    %1267 = vmatpush.bf16.msra.mxu0 %v894
    %1268 = vmatpush.bf16.msra.mxu0 %v890
    %1269 = vmatpush.bf16.msra.mxu0 %v886
    %1270 = vmatpush.bf16.msra.mxu0 %v882
    %1271 = vmatpush.bf16.msra.mxu0 %v878
    %1272 = vmatpush.bf16.msra.mxu0 %v874
    %1273 = vmatpush.bf16.msra.mxu0 %v870
    %1274 = vmatmul.bf16.gmra.mxu0 %v69
    %v1275 = vpop.f32.mrf.mxu0
    %v1276 = vadd.f32 %v274, %v1275
    %v1277 = vpop.f32.mrf.mxu0
    %v1278 = vadd.f32 %v274, %v1277
    %1279 = vdwg.mxu0
    %1280 = vmatpush.bf16.msra.mxu0 %v930
    %1281 = vmatpush.bf16.msra.mxu0 %v926
    %1282 = vmatpush.bf16.msra.mxu0 %v922
    %1283 = vmatpush.bf16.msra.mxu0 %v918
    %1284 = vmatpush.bf16.msra.mxu0 %v914
    %1285 = vmatpush.bf16.msra.mxu0 %v910
    %1286 = vmatpush.bf16.msra.mxu0 %v906
    %1287 = vmatpush.bf16.msra.mxu0 %v902
    %1288 = vmatmul.bf16.gmra.mxu0 %v70
    %v1289 = vpop.f32.mrf.mxu0
    %v1290 = vadd.f32 %v1276, %v1289
    %v1291 = vpop.f32.mrf.mxu0
    %v1292 = vadd.f32 %v1278, %v1291
    %1293 = vdwg.mxu0
    %1294 = vmatpush.bf16.msra.mxu0 %v962
    %1295 = vmatpush.bf16.msra.mxu0 %v958
    %1296 = vmatpush.bf16.msra.mxu0 %v954
    %1297 = vmatpush.bf16.msra.mxu0 %v950
    %1298 = vmatpush.bf16.msra.mxu0 %v946
    %1299 = vmatpush.bf16.msra.mxu0 %v942
    %1300 = vmatpush.bf16.msra.mxu0 %v938
    %1301 = vmatpush.bf16.msra.mxu0 %v934
    %1302 = vmatmul.bf16.gmra.mxu0 %v71
    %v1303 = vpop.f32.mrf.mxu0
    %v1304 = vadd.f32 %v1290, %v1303
    %v1305 = vpop.f32.mrf.mxu0
    %v1306 = vadd.f32 %v1292, %v1305
    %1307 = vdwg.mxu0
    %1308 = vmatpush.bf16.msra.mxu0 %v994
    %1309 = vmatpush.bf16.msra.mxu0 %v990
    %1310 = vmatpush.bf16.msra.mxu0 %v986
    %1311 = vmatpush.bf16.msra.mxu0 %v982
    %1312 = vmatpush.bf16.msra.mxu0 %v978
    %1313 = vmatpush.bf16.msra.mxu0 %v974
    %1314 = vmatpush.bf16.msra.mxu0 %v970
    %1315 = vmatpush.bf16.msra.mxu0 %v966
    %1316 = vmatmul.bf16.gmra.mxu0 %v72
    %v1317 = vpop.f32.mrf.mxu0
    %v1318 = vadd.f32 %v1304, %v1317
    %v1319 = vpop.f32.mrf.mxu0
    %v1320 = vadd.f32 %v1306, %v1319
    %1321 = vdwg.mxu0
    %1322 = vmatpush.bf16.msra.mxu0 %v1026
    %1323 = vmatpush.bf16.msra.mxu0 %v1022
    %1324 = vmatpush.bf16.msra.mxu0 %v1018
    %1325 = vmatpush.bf16.msra.mxu0 %v1014
    %1326 = vmatpush.bf16.msra.mxu0 %v1010
    %1327 = vmatpush.bf16.msra.mxu0 %v1006
    %1328 = vmatpush.bf16.msra.mxu0 %v1002
    %1329 = vmatpush.bf16.msra.mxu0 %v998
    %1330 = vmatmul.bf16.gmra.mxu0 %v73
    %v1331 = vpop.f32.mrf.mxu0
    %v1332 = vadd.f32 %v1318, %v1331
    %v1333 = vpop.f32.mrf.mxu0
    %v1334 = vadd.f32 %v1320, %v1333
    %1335 = vdwg.mxu0
    %1336 = vmatpush.bf16.msra.mxu0 %v1058
    %1337 = vmatpush.bf16.msra.mxu0 %v1054
    %1338 = vmatpush.bf16.msra.mxu0 %v1050
    %1339 = vmatpush.bf16.msra.mxu0 %v1046
    %1340 = vmatpush.bf16.msra.mxu0 %v1042
    %1341 = vmatpush.bf16.msra.mxu0 %v1038
    %1342 = vmatpush.bf16.msra.mxu0 %v1034
    %1343 = vmatpush.bf16.msra.mxu0 %v1030
    %1344 = vmatmul.bf16.gmra.mxu0 %v74
    %v1345 = vpop.f32.mrf.mxu0
    %v1346 = vadd.f32 %v1332, %v1345
    %v1347 = vpop.f32.mrf.mxu0
    %v1348 = vadd.f32 %v1334, %v1347
    %1349 = vdwg.mxu0
    %1350 = vmatpush.bf16.msra.mxu0 0
    %1351 = vmatpush.bf16.msra.mxu0 0
    %1352 = vmatpush.bf16.msra.mxu0 0
    %1353 = vmatpush.bf16.msra.mxu0 0
    %1354 = vmatpush.bf16.msra.mxu0 0
    %1355 = vmatpush.bf16.msra.mxu0 0
    %1356 = vmatpush.bf16.msra.mxu0 0
    %1357 = vmatpush.bf16.msra.mxu0 %v1062
    %1358 = vmatmul.bf16.gmra.mxu0 %v1264
    %v1359 = vpop.f32.mrf.mxu0
    %v1360 = vadd.f32 %v1346, %v1359
    %v1361 = vpop.f32.mrf.mxu0
    %v1362 = vadd.f32 %v1348, %v1361
    %1363 = vdwg.mxu0
    %1364 = vmatpush.bf16.msra.mxu0 %v899
    %1365 = vmatpush.bf16.msra.mxu0 %v895
    %1366 = vmatpush.bf16.msra.mxu0 %v891
    %1367 = vmatpush.bf16.msra.mxu0 %v887
    %1368 = vmatpush.bf16.msra.mxu0 %v883
    %1369 = vmatpush.bf16.msra.mxu0 %v879
    %1370 = vmatpush.bf16.msra.mxu0 %v875
    %1371 = vmatpush.bf16.msra.mxu0 %v871
    %1372 = vmatmul.bf16.gmra.mxu0 %v69
    %v1373 = vpop.f32.mrf.mxu0
    %v1374 = vadd.f32 %v275, %v1373
    %v1375 = vpop.f32.mrf.mxu0
    %v1376 = vadd.f32 %v275, %v1375
    %1377 = vdwg.mxu0
    %1378 = vmatpush.bf16.msra.mxu0 %v931
    %1379 = vmatpush.bf16.msra.mxu0 %v927
    %1380 = vmatpush.bf16.msra.mxu0 %v923
    %1381 = vmatpush.bf16.msra.mxu0 %v919
    %1382 = vmatpush.bf16.msra.mxu0 %v915
    %1383 = vmatpush.bf16.msra.mxu0 %v911
    %1384 = vmatpush.bf16.msra.mxu0 %v907
    %1385 = vmatpush.bf16.msra.mxu0 %v903
    %1386 = vmatmul.bf16.gmra.mxu0 %v70
    %v1387 = vpop.f32.mrf.mxu0
    %v1388 = vadd.f32 %v1374, %v1387
    %v1389 = vpop.f32.mrf.mxu0
    %v1390 = vadd.f32 %v1376, %v1389
    %1391 = vdwg.mxu0
    %1392 = vmatpush.bf16.msra.mxu0 %v963
    %1393 = vmatpush.bf16.msra.mxu0 %v959
    %1394 = vmatpush.bf16.msra.mxu0 %v955
    %1395 = vmatpush.bf16.msra.mxu0 %v951
    %1396 = vmatpush.bf16.msra.mxu0 %v947
    %1397 = vmatpush.bf16.msra.mxu0 %v943
    %1398 = vmatpush.bf16.msra.mxu0 %v939
    %1399 = vmatpush.bf16.msra.mxu0 %v935
    %1400 = vmatmul.bf16.gmra.mxu0 %v71
    %v1401 = vpop.f32.mrf.mxu0
    %v1402 = vadd.f32 %v1388, %v1401
    %v1403 = vpop.f32.mrf.mxu0
    %v1404 = vadd.f32 %v1390, %v1403
    %1405 = vdwg.mxu0
    %1406 = vmatpush.bf16.msra.mxu0 %v995
    %1407 = vmatpush.bf16.msra.mxu0 %v991
    %1408 = vmatpush.bf16.msra.mxu0 %v987
    %1409 = vmatpush.bf16.msra.mxu0 %v983
    %1410 = vmatpush.bf16.msra.mxu0 %v979
    %1411 = vmatpush.bf16.msra.mxu0 %v975
    %1412 = vmatpush.bf16.msra.mxu0 %v971
    %1413 = vmatpush.bf16.msra.mxu0 %v967
    %1414 = vmatmul.bf16.gmra.mxu0 %v72
    %v1415 = vpop.f32.mrf.mxu0
    %v1416 = vadd.f32 %v1402, %v1415
    %v1417 = vpop.f32.mrf.mxu0
    %v1418 = vadd.f32 %v1404, %v1417
    %1419 = vdwg.mxu0
    %1420 = vmatpush.bf16.msra.mxu0 %v1027
    %1421 = vmatpush.bf16.msra.mxu0 %v1023
    %1422 = vmatpush.bf16.msra.mxu0 %v1019
    %1423 = vmatpush.bf16.msra.mxu0 %v1015
    %1424 = vmatpush.bf16.msra.mxu0 %v1011
    %1425 = vmatpush.bf16.msra.mxu0 %v1007
    %1426 = vmatpush.bf16.msra.mxu0 %v1003
    %1427 = vmatpush.bf16.msra.mxu0 %v999
    %1428 = vmatmul.bf16.gmra.mxu0 %v73
    %v1429 = vpop.f32.mrf.mxu0
    %v1430 = vadd.f32 %v1416, %v1429
    %v1431 = vpop.f32.mrf.mxu0
    %v1432 = vadd.f32 %v1418, %v1431
    %1433 = vdwg.mxu0
    %1434 = vmatpush.bf16.msra.mxu0 %v1059
    %1435 = vmatpush.bf16.msra.mxu0 %v1055
    %1436 = vmatpush.bf16.msra.mxu0 %v1051
    %1437 = vmatpush.bf16.msra.mxu0 %v1047
    %1438 = vmatpush.bf16.msra.mxu0 %v1043
    %1439 = vmatpush.bf16.msra.mxu0 %v1039
    %1440 = vmatpush.bf16.msra.mxu0 %v1035
    %1441 = vmatpush.bf16.msra.mxu0 %v1031
    %1442 = vmatmul.bf16.gmra.mxu0 %v74
    %v1443 = vpop.f32.mrf.mxu0
    %v1444 = vadd.f32 %v1430, %v1443
    %v1445 = vpop.f32.mrf.mxu0
    %v1446 = vadd.f32 %v1432, %v1445
    %1447 = vdwg.mxu0
    %1448 = vmatpush.bf16.msra.mxu0 0
    %1449 = vmatpush.bf16.msra.mxu0 0
    %1450 = vmatpush.bf16.msra.mxu0 0
    %1451 = vmatpush.bf16.msra.mxu0 0
    %1452 = vmatpush.bf16.msra.mxu0 0
    %1453 = vmatpush.bf16.msra.mxu0 0
    %1454 = vmatpush.bf16.msra.mxu0 0
    %1455 = vmatpush.bf16.msra.mxu0 %v1063
    %1456 = vmatmul.bf16.gmra.mxu0 %v1264
    %v1457 = vpop.f32.mrf.mxu0
    %v1458 = vadd.f32 %v1444, %v1457
    %v1459 = vpop.f32.mrf.mxu0
    %v1460 = vadd.f32 %v1446, %v1459
    %1461 = vdwg.mxu0
    %1462 = vmatpush.bf16.msra.mxu0 %v900
    %1463 = vmatpush.bf16.msra.mxu0 %v896
    %1464 = vmatpush.bf16.msra.mxu0 %v892
    %1465 = vmatpush.bf16.msra.mxu0 %v888
    %1466 = vmatpush.bf16.msra.mxu0 %v884
    %1467 = vmatpush.bf16.msra.mxu0 %v880
    %1468 = vmatpush.bf16.msra.mxu0 %v876
    %1469 = vmatpush.bf16.msra.mxu0 %v872
    %1470 = vmatmul.bf16.gmra.mxu0 %v69
    %v1471 = vpop.f32.mrf.mxu0
    %v1472 = vadd.f32 %v276, %v1471
    %v1473 = vpop.f32.mrf.mxu0
    %v1474 = vadd.f32 %v276, %v1473
    %1475 = vdwg.mxu0
    %1476 = vmatpush.bf16.msra.mxu0 %v932
    %1477 = vmatpush.bf16.msra.mxu0 %v928
    %1478 = vmatpush.bf16.msra.mxu0 %v924
    %1479 = vmatpush.bf16.msra.mxu0 %v920
    %1480 = vmatpush.bf16.msra.mxu0 %v916
    %1481 = vmatpush.bf16.msra.mxu0 %v912
    %1482 = vmatpush.bf16.msra.mxu0 %v908
    %1483 = vmatpush.bf16.msra.mxu0 %v904
    %1484 = vmatmul.bf16.gmra.mxu0 %v70
    %v1485 = vpop.f32.mrf.mxu0
    %v1486 = vadd.f32 %v1472, %v1485
    %v1487 = vpop.f32.mrf.mxu0
    %v1488 = vadd.f32 %v1474, %v1487
    %1489 = vdwg.mxu0
    %1490 = vmatpush.bf16.msra.mxu0 %v964
    %1491 = vmatpush.bf16.msra.mxu0 %v960
    %1492 = vmatpush.bf16.msra.mxu0 %v956
    %1493 = vmatpush.bf16.msra.mxu0 %v952
    %1494 = vmatpush.bf16.msra.mxu0 %v948
    %1495 = vmatpush.bf16.msra.mxu0 %v944
    %1496 = vmatpush.bf16.msra.mxu0 %v940
    %1497 = vmatpush.bf16.msra.mxu0 %v936
    %1498 = vmatmul.bf16.gmra.mxu0 %v71
    %v1499 = vpop.f32.mrf.mxu0
    %v1500 = vadd.f32 %v1486, %v1499
    %v1501 = vpop.f32.mrf.mxu0
    %v1502 = vadd.f32 %v1488, %v1501
    %1503 = vdwg.mxu0
    %1504 = vmatpush.bf16.msra.mxu0 %v996
    %1505 = vmatpush.bf16.msra.mxu0 %v992
    %1506 = vmatpush.bf16.msra.mxu0 %v988
    %1507 = vmatpush.bf16.msra.mxu0 %v984
    %1508 = vmatpush.bf16.msra.mxu0 %v980
    %1509 = vmatpush.bf16.msra.mxu0 %v976
    %1510 = vmatpush.bf16.msra.mxu0 %v972
    %1511 = vmatpush.bf16.msra.mxu0 %v968
    %1512 = vmatmul.bf16.gmra.mxu0 %v72
    %v1513 = vpop.f32.mrf.mxu0
    %v1514 = vadd.f32 %v1500, %v1513
    %v1515 = vpop.f32.mrf.mxu0
    %v1516 = vadd.f32 %v1502, %v1515
    %1517 = vdwg.mxu0
    %1518 = vmatpush.bf16.msra.mxu0 %v1028
    %1519 = vmatpush.bf16.msra.mxu0 %v1024
    %1520 = vmatpush.bf16.msra.mxu0 %v1020
    %1521 = vmatpush.bf16.msra.mxu0 %v1016
    %1522 = vmatpush.bf16.msra.mxu0 %v1012
    %1523 = vmatpush.bf16.msra.mxu0 %v1008
    %1524 = vmatpush.bf16.msra.mxu0 %v1004
    %1525 = vmatpush.bf16.msra.mxu0 %v1000
    %1526 = vmatmul.bf16.gmra.mxu0 %v73
    %v1527 = vpop.f32.mrf.mxu0
    %v1528 = vadd.f32 %v1514, %v1527
    %v1529 = vpop.f32.mrf.mxu0
    %v1530 = vadd.f32 %v1516, %v1529
    %1531 = vdwg.mxu0
    %1532 = vmatpush.bf16.msra.mxu0 %v1060
    %1533 = vmatpush.bf16.msra.mxu0 %v1056
    %1534 = vmatpush.bf16.msra.mxu0 %v1052
    %1535 = vmatpush.bf16.msra.mxu0 %v1048
    %1536 = vmatpush.bf16.msra.mxu0 %v1044
    %1537 = vmatpush.bf16.msra.mxu0 %v1040
    %1538 = vmatpush.bf16.msra.mxu0 %v1036
    %1539 = vmatpush.bf16.msra.mxu0 %v1032
    %1540 = vmatmul.bf16.gmra.mxu0 %v74
    %v1541 = vpop.f32.mrf.mxu0
    %v1542 = vadd.f32 %v1528, %v1541
    %v1543 = vpop.f32.mrf.mxu0
    %v1544 = vadd.f32 %v1530, %v1543
    %1545 = vdwg.mxu0
    %1546 = vmatpush.bf16.msra.mxu0 0
    %1547 = vmatpush.bf16.msra.mxu0 0
    %1548 = vmatpush.bf16.msra.mxu0 0
    %1549 = vmatpush.bf16.msra.mxu0 0
    %1550 = vmatpush.bf16.msra.mxu0 0
    %1551 = vmatpush.bf16.msra.mxu0 0
    %1552 = vmatpush.bf16.msra.mxu0 0
    %1553 = vmatpush.bf16.msra.mxu0 %v1064
    %1554 = vmatmul.bf16.gmra.mxu0 %v1264
    %v1555 = vpop.f32.mrf.mxu0
    %v1556 = vadd.f32 %v1542, %v1555
    %v1557 = vpop.f32.mrf.mxu0
    %v1558 = vadd.f32 %v1544, %v1557
    %1559 = vdwg.mxu0
    %1560 = vmatpush.bf16.msra.mxu0 %v901
    %1561 = vmatpush.bf16.msra.mxu0 %v897
    %1562 = vmatpush.bf16.msra.mxu0 %v893
    %1563 = vmatpush.bf16.msra.mxu0 %v889
    %1564 = vmatpush.bf16.msra.mxu0 %v885
    %1565 = vmatpush.bf16.msra.mxu0 %v881
    %1566 = vmatpush.bf16.msra.mxu0 %v877
    %1567 = vmatpush.bf16.msra.mxu0 %v873
    %1568 = vmatmul.bf16.gmra.mxu0 %v69
    %v1569 = vpop.f32.mrf.mxu0
    %v1570 = vadd.f32 %v277, %v1569
    %v1571 = vpop.f32.mrf.mxu0
    %v1572 = vadd.f32 %v277, %v1571
    %1573 = vdwg.mxu0
    %1574 = vmatpush.bf16.msra.mxu0 %v933
    %1575 = vmatpush.bf16.msra.mxu0 %v929
    %1576 = vmatpush.bf16.msra.mxu0 %v925
    %1577 = vmatpush.bf16.msra.mxu0 %v921
    %1578 = vmatpush.bf16.msra.mxu0 %v917
    %1579 = vmatpush.bf16.msra.mxu0 %v913
    %1580 = vmatpush.bf16.msra.mxu0 %v909
    %1581 = vmatpush.bf16.msra.mxu0 %v905
    %1582 = vmatmul.bf16.gmra.mxu0 %v70
    %v1583 = vpop.f32.mrf.mxu0
    %v1584 = vadd.f32 %v1570, %v1583
    %v1585 = vpop.f32.mrf.mxu0
    %v1586 = vadd.f32 %v1572, %v1585
    %1587 = vdwg.mxu0
    %1588 = vmatpush.bf16.msra.mxu0 %v965
    %1589 = vmatpush.bf16.msra.mxu0 %v961
    %1590 = vmatpush.bf16.msra.mxu0 %v957
    %1591 = vmatpush.bf16.msra.mxu0 %v953
    %1592 = vmatpush.bf16.msra.mxu0 %v949
    %1593 = vmatpush.bf16.msra.mxu0 %v945
    %1594 = vmatpush.bf16.msra.mxu0 %v941
    %1595 = vmatpush.bf16.msra.mxu0 %v937
    %1596 = vmatmul.bf16.gmra.mxu0 %v71
    %v1597 = vpop.f32.mrf.mxu0
    %v1598 = vadd.f32 %v1584, %v1597
    %v1599 = vpop.f32.mrf.mxu0
    %v1600 = vadd.f32 %v1586, %v1599
    %1601 = vdwg.mxu0
    %1602 = vmatpush.bf16.msra.mxu0 %v997
    %1603 = vmatpush.bf16.msra.mxu0 %v993
    %1604 = vmatpush.bf16.msra.mxu0 %v989
    %1605 = vmatpush.bf16.msra.mxu0 %v985
    %1606 = vmatpush.bf16.msra.mxu0 %v981
    %1607 = vmatpush.bf16.msra.mxu0 %v977
    %1608 = vmatpush.bf16.msra.mxu0 %v973
    %1609 = vmatpush.bf16.msra.mxu0 %v969
    %1610 = vmatmul.bf16.gmra.mxu0 %v72
    %v1611 = vpop.f32.mrf.mxu0
    %v1612 = vadd.f32 %v1598, %v1611
    %v1613 = vpop.f32.mrf.mxu0
    %v1614 = vadd.f32 %v1600, %v1613
    %1615 = vdwg.mxu0
    %1616 = vmatpush.bf16.msra.mxu0 %v1029
    %1617 = vmatpush.bf16.msra.mxu0 %v1025
    %1618 = vmatpush.bf16.msra.mxu0 %v1021
    %1619 = vmatpush.bf16.msra.mxu0 %v1017
    %1620 = vmatpush.bf16.msra.mxu0 %v1013
    %1621 = vmatpush.bf16.msra.mxu0 %v1009
    %1622 = vmatpush.bf16.msra.mxu0 %v1005
    %1623 = vmatpush.bf16.msra.mxu0 %v1001
    %1624 = vmatmul.bf16.gmra.mxu0 %v73
    %v1625 = vpop.f32.mrf.mxu0
    %v1626 = vadd.f32 %v1612, %v1625
    %v1627 = vpop.f32.mrf.mxu0
    %v1628 = vadd.f32 %v1614, %v1627
    %1629 = vdwg.mxu0
    %1630 = vmatpush.bf16.msra.mxu0 %v1061
    %1631 = vmatpush.bf16.msra.mxu0 %v1057
    %1632 = vmatpush.bf16.msra.mxu0 %v1053
    %1633 = vmatpush.bf16.msra.mxu0 %v1049
    %1634 = vmatpush.bf16.msra.mxu0 %v1045
    %1635 = vmatpush.bf16.msra.mxu0 %v1041
    %1636 = vmatpush.bf16.msra.mxu0 %v1037
    %1637 = vmatpush.bf16.msra.mxu0 %v1033
    %1638 = vmatmul.bf16.gmra.mxu0 %v74
    %v1639 = vpop.f32.mrf.mxu0
    %v1640 = vadd.f32 %v1626, %v1639
    %v1641 = vpop.f32.mrf.mxu0
    %v1642 = vadd.f32 %v1628, %v1641
    %1643 = vdwg.mxu0
    %1644 = vmatpush.bf16.msra.mxu0 0
    %1645 = vmatpush.bf16.msra.mxu0 0
    %1646 = vmatpush.bf16.msra.mxu0 0
    %1647 = vmatpush.bf16.msra.mxu0 0
    %1648 = vmatpush.bf16.msra.mxu0 0
    %1649 = vmatpush.bf16.msra.mxu0 0
    %1650 = vmatpush.bf16.msra.mxu0 0
    %1651 = vmatpush.bf16.msra.mxu0 %v1065
    %1652 = vmatmul.bf16.gmra.mxu0 %v1264
    %v1653 = vpop.f32.mrf.mxu0
    %v1654 = vadd.f32 %v1640, %v1653
    %v1655 = vpop.f32.mrf.mxu0
    %v1656 = vadd.f32 %v1642, %v1655
    %1657 = vdwg.mxu0
    %v1658 = vmax.f32 %v1360, 0.0
    %v1659 = vmax.f32 %v1458, 0.0
    %v1660 = vmax.f32 %v1556, 0.0
    %v1661 = vmax.f32 %v1654, 0.0
    %v1662 = vmax.f32 %v1362, 0.0
    %v1663 = vmax.f32 %v1460, 0.0
    %v1664 = vmax.f32 %v1558, 0.0
    %v1665 = vmax.f32 %v1656, 0.0
    %v1666 = vpack.c.bf16 %v1662, %v1658
    %v1667 = vpack.c.bf16 %v1663, %v1659
    %v1668 = vpack.c.bf16 %v1664, %v1660
    %v1669 = vpack.c.bf16 %v1665, %v1661
    %v1670 = vld [vmem:[%s3] sm:$0xff]
    %v1671 = vld [vmem:[%s3 + $0x8] sm:$0xff]
    %v1672 = vld [vmem:[%s3 + $0x10] sm:$0xff]
    %v1673 = vld [vmem:[%s3 + $0x18] sm:$0xff]
    %v1674 = vld [vmem:[%s3 + $0x20] sm:$0xff]
    %v1675 = vld [vmem:[%s3 + $0x28] sm:$0xff]
    %v1676 = vld [vmem:[%s3 + $0x30] sm:$0xff]
    %v1677 = vld [vmem:[%s3 + $0x38] sm:$0xff]
    %v1678 = vld [vmem:[%s3 + $0x40] sm:$0xff]
    %v1679 = vld [vmem:[%s3 + $0x48] sm:$0xff]
    %v1680 = vld [vmem:[%s3 + $0x50] sm:$0xff]
    %v1681 = vld [vmem:[%s3 + $0x58] sm:$0xff]
    %v1682 = vld [vmem:[%s3 + $0x60] sm:$0xff]
    %v1683 = vld [vmem:[%s3 + $0x68] sm:$0xff]
    %v1684 = vld [vmem:[%s3 + $0x70] sm:$0xff]
    %v1685 = vld [vmem:[%s3 + $0x78] sm:$0xff]
    %v1686 = vld [vmem:[%s3 + $0x80] sm:$0xff]
    %v1687 = vld [vmem:[%s3 + $0x88] sm:$0xff]
    %v1688 = vld [vmem:[%s3 + $0x90] sm:$0xff]
    %v1689 = vld [vmem:[%s3 + $0x98] sm:$0xff]
    %v1690 = vld [vmem:[%s3 + $0xa0] sm:$0xff]
    %v1691 = vld [vmem:[%s3 + $0xa8] sm:$0xff]
    %v1692 = vld [vmem:[%s3 + $0xb0] sm:$0xff]
    %v1693 = vld [vmem:[%s3 + $0xb8] sm:$0xff]
    %v1694 = vld [vmem:[%s3 + $0xc0] sm:$0xff]
    %v1695 = vld [vmem:[%s3 + $0xc8] sm:$0xff]
    %v1696 = vld [vmem:[%s3 + $0xd0] sm:$0xff]
    %v1697 = vld [vmem:[%s3 + $0xd8] sm:$0xff]
    %v1698 = vld [vmem:[%s3 + $0xe0] sm:$0xff]
    %v1699 = vld [vmem:[%s3 + $0xe8] sm:$0xff]
    %v1700 = vld [vmem:[%s3 + $0xf0] sm:$0xff]
    %v1701 = vld [vmem:[%s3 + $0xf8] sm:$0xff]
    %v1702 = vld [vmem:[%s3 + $0x100] sm:$0xff]
    %v1703 = vld [vmem:[%s3 + $0x108] sm:$0xff]
    %v1704 = vld [vmem:[%s3 + $0x110] sm:$0xff]
    %v1705 = vld [vmem:[%s3 + $0x118] sm:$0xff]
    %v1706 = vld [vmem:[%s3 + $0x120] sm:$0xff]
    %v1707 = vld [vmem:[%s3 + $0x128] sm:$0xff]
    %v1708 = vld [vmem:[%s3 + $0x130] sm:$0xff]
    %v1709 = vld [vmem:[%s3 + $0x138] sm:$0xff]
    %v1710 = vld [vmem:[%s3 + $0x140] sm:$0xff]
    %v1711 = vld [vmem:[%s3 + $0x148] sm:$0xff]
    %v1712 = vld [vmem:[%s3 + $0x150] sm:$0xff]
    %v1713 = vld [vmem:[%s3 + $0x158] sm:$0xff]
    %v1714 = vld [vmem:[%s3 + $0x160] sm:$0xff]
    %v1715 = vld [vmem:[%s3 + $0x168] sm:$0xff]
    %v1716 = vld [vmem:[%s3 + $0x170] sm:$0xff]
    %v1717 = vld [vmem:[%s3 + $0x178] sm:$0xff]
    %v1718 = vld [vmem:[%s3 + $0x180] sm:$0xff]
    %v1719 = vld [vmem:[%s3 + $0x188] sm:$0xff]
    %v1720 = vld [vmem:[%s3 + $0x190] sm:$0xff]
    %v1721 = vld [vmem:[%s3 + $0x198] sm:$0xff]
    %v1722 = vld [vmem:[%s3 + $0x1a0] sm:$0xff]
    %v1723 = vld [vmem:[%s3 + $0x1a8] sm:$0xff]
    %v1724 = vld [vmem:[%s3 + $0x1b0] sm:$0xff]
    %v1725 = vld [vmem:[%s3 + $0x1b8] sm:$0xff]
    %v1726 = vld [vmem:[%s3 + $0x1c0] sm:$0xff]
    %v1727 = vld [vmem:[%s3 + $0x1c8] sm:$0xff]
    %v1728 = vld [vmem:[%s3 + $0x1d0] sm:$0xff]
    %v1729 = vld [vmem:[%s3 + $0x1d8] sm:$0xff]
    %v1730 = vld [vmem:[%s3 + $0x1e0] sm:$0xff]
    %v1731 = vld [vmem:[%s3 + $0x1e8] sm:$0xff]
    %v1732 = vld [vmem:[%s3 + $0x1f0] sm:$0xff]
    %v1733 = vld [vmem:[%s3 + $0x1f8] sm:$0xff]
    %v1734 = vld [vmem:[%s4] sm:$0x3]
    %v1736 = vperm.slane %v1734, 0
    %v1737 = vperm.slane %v1734, 1
    %v1804 = vunpack.c.l.b16 %v1670
    %v1805 = vunpack.c.h.b16 %v1670
    %v1806 = vunpack.c.l.b16 %v1671
    %v1807 = vunpack.c.h.b16 %v1671
    %v1808 = vunpack.c.l.b16 %v1672
    %v1809 = vunpack.c.h.b16 %v1672
    %v1810 = vunpack.c.l.b16 %v1673
    %v1811 = vunpack.c.h.b16 %v1673
    %v1812 = vunpack.c.l.b16 %v1674
    %v1813 = vunpack.c.h.b16 %v1674
    %v1814 = vunpack.c.l.b16 %v1675
    %v1815 = vunpack.c.h.b16 %v1675
    %v1816 = vunpack.c.l.b16 %v1676
    %v1817 = vunpack.c.h.b16 %v1676
    %v1818 = vunpack.c.l.b16 %v1677
    %v1819 = vunpack.c.h.b16 %v1677
    %v1820 = vunpack.c.l.b16 %v1678
    %v1821 = vunpack.c.h.b16 %v1678
    %v1822 = vunpack.c.l.b16 %v1679
    %v1823 = vunpack.c.h.b16 %v1679
    %v1824 = vunpack.c.l.b16 %v1680
    %v1825 = vunpack.c.h.b16 %v1680
    %v1826 = vunpack.c.l.b16 %v1681
    %v1827 = vunpack.c.h.b16 %v1681
    %v1828 = vunpack.c.l.b16 %v1682
    %v1829 = vunpack.c.h.b16 %v1682
    %v1830 = vunpack.c.l.b16 %v1683
    %v1831 = vunpack.c.h.b16 %v1683
    %v1832 = vunpack.c.l.b16 %v1684
    %v1833 = vunpack.c.h.b16 %v1684
    %v1834 = vunpack.c.l.b16 %v1685
    %v1835 = vunpack.c.h.b16 %v1685
    %v1836 = vunpack.c.l.b16 %v1686
    %v1837 = vunpack.c.h.b16 %v1686
    %v1838 = vunpack.c.l.b16 %v1687
    %v1839 = vunpack.c.h.b16 %v1687
    %v1840 = vunpack.c.l.b16 %v1688
    %v1841 = vunpack.c.h.b16 %v1688
    %v1842 = vunpack.c.l.b16 %v1689
    %v1843 = vunpack.c.h.b16 %v1689
    %v1844 = vunpack.c.l.b16 %v1690
    %v1845 = vunpack.c.h.b16 %v1690
    %v1846 = vunpack.c.l.b16 %v1691
    %v1847 = vunpack.c.h.b16 %v1691
    %v1848 = vunpack.c.l.b16 %v1692
    %v1849 = vunpack.c.h.b16 %v1692
    %v1850 = vunpack.c.l.b16 %v1693
    %v1851 = vunpack.c.h.b16 %v1693
    %v1852 = vunpack.c.l.b16 %v1694
    %v1853 = vunpack.c.h.b16 %v1694
    %v1854 = vunpack.c.l.b16 %v1695
    %v1855 = vunpack.c.h.b16 %v1695
    %v1856 = vunpack.c.l.b16 %v1696
    %v1857 = vunpack.c.h.b16 %v1696
    %v1858 = vunpack.c.l.b16 %v1697
    %v1859 = vunpack.c.h.b16 %v1697
    %v1860 = vunpack.c.l.b16 %v1698
    %v1861 = vunpack.c.h.b16 %v1698
    %v1862 = vunpack.c.l.b16 %v1699
    %v1863 = vunpack.c.h.b16 %v1699
    %v1864 = vunpack.c.l.b16 %v1700
    %v1865 = vunpack.c.h.b16 %v1700
    %v1866 = vunpack.c.l.b16 %v1701
    %v1867 = vunpack.c.h.b16 %v1701
    %v1868 = vunpack.c.l.b16 %v1702
    %v1869 = vunpack.c.h.b16 %v1702
    %v1870 = vunpack.c.l.b16 %v1703
    %v1871 = vunpack.c.h.b16 %v1703
    %v1872 = vunpack.c.l.b16 %v1704
    %v1873 = vunpack.c.h.b16 %v1704
    %v1874 = vunpack.c.l.b16 %v1705
    %v1875 = vunpack.c.h.b16 %v1705
    %v1876 = vunpack.c.l.b16 %v1706
    %v1877 = vunpack.c.h.b16 %v1706
    %v1878 = vunpack.c.l.b16 %v1707
    %v1879 = vunpack.c.h.b16 %v1707
    %v1880 = vunpack.c.l.b16 %v1708
    %v1881 = vunpack.c.h.b16 %v1708
    %v1882 = vunpack.c.l.b16 %v1709
    %v1883 = vunpack.c.h.b16 %v1709
    %v1884 = vunpack.c.l.b16 %v1710
    %v1885 = vunpack.c.h.b16 %v1710
    %v1886 = vunpack.c.l.b16 %v1711
    %v1887 = vunpack.c.h.b16 %v1711
    %v1888 = vunpack.c.l.b16 %v1712
    %v1889 = vunpack.c.h.b16 %v1712
    %v1890 = vunpack.c.l.b16 %v1713
    %v1891 = vunpack.c.h.b16 %v1713
    %v1892 = vunpack.c.l.b16 %v1714
    %v1893 = vunpack.c.h.b16 %v1714
    %v1894 = vunpack.c.l.b16 %v1715
    %v1895 = vunpack.c.h.b16 %v1715
    %v1896 = vunpack.c.l.b16 %v1716
    %v1897 = vunpack.c.h.b16 %v1716
    %v1898 = vunpack.c.l.b16 %v1717
    %v1899 = vunpack.c.h.b16 %v1717
    %v1900 = vunpack.c.l.b16 %v1718
    %v1901 = vunpack.c.h.b16 %v1718
    %v1902 = vunpack.c.l.b16 %v1719
    %v1903 = vunpack.c.h.b16 %v1719
    %v1904 = vunpack.c.l.b16 %v1720
    %v1905 = vunpack.c.h.b16 %v1720
    %v1906 = vunpack.c.l.b16 %v1721
    %v1907 = vunpack.c.h.b16 %v1721
    %v1908 = vunpack.c.l.b16 %v1722
    %v1909 = vunpack.c.h.b16 %v1722
    %v1910 = vunpack.c.l.b16 %v1723
    %v1911 = vunpack.c.h.b16 %v1723
    %v1912 = vunpack.c.l.b16 %v1724
    %v1913 = vunpack.c.h.b16 %v1724
    %v1914 = vunpack.c.l.b16 %v1725
    %v1915 = vunpack.c.h.b16 %v1725
    %v1916 = vunpack.c.l.b16 %v1726
    %v1917 = vunpack.c.h.b16 %v1726
    %v1918 = vunpack.c.l.b16 %v1727
    %v1919 = vunpack.c.h.b16 %v1727
    %v1920 = vunpack.c.l.b16 %v1728
    %v1921 = vunpack.c.h.b16 %v1728
    %v1922 = vunpack.c.l.b16 %v1729
    %v1923 = vunpack.c.h.b16 %v1729
    %v1924 = vunpack.c.l.b16 %v1730
    %v1925 = vunpack.c.h.b16 %v1730
    %v1926 = vunpack.c.l.b16 %v1731
    %v1927 = vunpack.c.h.b16 %v1731
    %v1928 = vunpack.c.l.b16 %v1732
    %v1929 = vunpack.c.h.b16 %v1732
    %v1930 = vunpack.c.l.b16 %v1733
    %v1931 = vunpack.c.h.b16 %v1733
    %v1932 = vpack.c.b16 %v1806, %v1804
    %v1933 = vpack.c.b16 %v1807, %v1805
    %v1934 = vpack.c.b16 %v1810, %v1808
    %v1935 = vpack.c.b16 %v1811, %v1809
    %v1936 = vpack.c.b16 %v1814, %v1812
    %v1937 = vpack.c.b16 %v1815, %v1813
    %v1938 = vpack.c.b16 %v1818, %v1816
    %v1939 = vpack.c.b16 %v1819, %v1817
    %v1940 = vpack.c.b16 %v1822, %v1820
    %v1941 = vpack.c.b16 %v1823, %v1821
    %v1942 = vpack.c.b16 %v1826, %v1824
    %v1943 = vpack.c.b16 %v1827, %v1825
    %v1944 = vpack.c.b16 %v1830, %v1828
    %v1945 = vpack.c.b16 %v1831, %v1829
    %v1946 = vpack.c.b16 %v1834, %v1832
    %v1947 = vpack.c.b16 %v1835, %v1833
    %v1948 = vpack.c.b16 %v1838, %v1836
    %v1949 = vpack.c.b16 %v1839, %v1837
    %v1950 = vpack.c.b16 %v1842, %v1840
    %v1951 = vpack.c.b16 %v1843, %v1841
    %v1952 = vpack.c.b16 %v1846, %v1844
    %v1953 = vpack.c.b16 %v1847, %v1845
    %v1954 = vpack.c.b16 %v1850, %v1848
    %v1955 = vpack.c.b16 %v1851, %v1849
    %v1956 = vpack.c.b16 %v1854, %v1852
    %v1957 = vpack.c.b16 %v1855, %v1853
    %v1958 = vpack.c.b16 %v1858, %v1856
    %v1959 = vpack.c.b16 %v1859, %v1857
    %v1960 = vpack.c.b16 %v1862, %v1860
    %v1961 = vpack.c.b16 %v1863, %v1861
    %v1962 = vpack.c.b16 %v1866, %v1864
    %v1963 = vpack.c.b16 %v1867, %v1865
    %v1964 = vpack.c.b16 %v1870, %v1868
    %v1965 = vpack.c.b16 %v1871, %v1869
    %v1966 = vpack.c.b16 %v1874, %v1872
    %v1967 = vpack.c.b16 %v1875, %v1873
    %v1968 = vpack.c.b16 %v1878, %v1876
    %v1969 = vpack.c.b16 %v1879, %v1877
    %v1970 = vpack.c.b16 %v1882, %v1880
    %v1971 = vpack.c.b16 %v1883, %v1881
    %v1972 = vpack.c.b16 %v1886, %v1884
    %v1973 = vpack.c.b16 %v1887, %v1885
    %v1974 = vpack.c.b16 %v1890, %v1888
    %v1975 = vpack.c.b16 %v1891, %v1889
    %v1976 = vpack.c.b16 %v1894, %v1892
    %v1977 = vpack.c.b16 %v1895, %v1893
    %v1978 = vpack.c.b16 %v1898, %v1896
    %v1979 = vpack.c.b16 %v1899, %v1897
    %v1980 = vpack.c.b16 %v1902, %v1900
    %v1981 = vpack.c.b16 %v1903, %v1901
    %v1982 = vpack.c.b16 %v1906, %v1904
    %v1983 = vpack.c.b16 %v1907, %v1905
    %v1984 = vpack.c.b16 %v1910, %v1908
    %v1985 = vpack.c.b16 %v1911, %v1909
    %v1986 = vpack.c.b16 %v1914, %v1912
    %v1987 = vpack.c.b16 %v1915, %v1913
    %v1988 = vpack.c.b16 %v1918, %v1916
    %v1989 = vpack.c.b16 %v1919, %v1917
    %v1990 = vpack.c.b16 %v1922, %v1920
    %v1991 = vpack.c.b16 %v1923, %v1921
    %v1992 = vpack.c.b16 %v1926, %v1924
    %v1993 = vpack.c.b16 %v1927, %v1925
    %v1994 = vpack.c.b16 %v1930, %v1928
    %v1995 = vpack.c.b16 %v1931, %v1929
    %2060 = vmatpush.bf16.msra.mxu0 %v1946
    %2061 = vmatpush.bf16.msra.mxu0 %v1944
    %2062 = vmatpush.bf16.msra.mxu0 %v1942
    %2063 = vmatpush.bf16.msra.mxu0 %v1940
    %2064 = vmatpush.bf16.msra.mxu0 %v1938
    %2065 = vmatpush.bf16.msra.mxu0 %v1936
    %2066 = vmatpush.bf16.msra.mxu0 %v1934
    %2067 = vmatpush.bf16.msra.mxu0 %v1932
    %2068 = vmatmul.bf16.gmra.mxu0 %v1666
    %v2069 = vpop.f32.mrf.mxu0
    %v2070 = vadd.f32 %v1736, %v2069
    %v2071 = vpop.f32.mrf.mxu0
    %v2072 = vadd.f32 %v1736, %v2071
    %2073 = vdwg.mxu0
    %2074 = vmatpush.bf16.msra.mxu0 %v1962
    %2075 = vmatpush.bf16.msra.mxu0 %v1960
    %2076 = vmatpush.bf16.msra.mxu0 %v1958
    %2077 = vmatpush.bf16.msra.mxu0 %v1956
    %2078 = vmatpush.bf16.msra.mxu0 %v1954
    %2079 = vmatpush.bf16.msra.mxu0 %v1952
    %2080 = vmatpush.bf16.msra.mxu0 %v1950
    %2081 = vmatpush.bf16.msra.mxu0 %v1948
    %2082 = vmatmul.bf16.gmra.mxu0 %v1667
    %v2083 = vpop.f32.mrf.mxu0
    %v2084 = vadd.f32 %v2070, %v2083
    %v2085 = vpop.f32.mrf.mxu0
    %v2086 = vadd.f32 %v2072, %v2085
    %2087 = vdwg.mxu0
    %2088 = vmatpush.bf16.msra.mxu0 %v1978
    %2089 = vmatpush.bf16.msra.mxu0 %v1976
    %2090 = vmatpush.bf16.msra.mxu0 %v1974
    %2091 = vmatpush.bf16.msra.mxu0 %v1972
    %2092 = vmatpush.bf16.msra.mxu0 %v1970
    %2093 = vmatpush.bf16.msra.mxu0 %v1968
    %2094 = vmatpush.bf16.msra.mxu0 %v1966
    %2095 = vmatpush.bf16.msra.mxu0 %v1964
    %2096 = vmatmul.bf16.gmra.mxu0 %v1668
    %v2097 = vpop.f32.mrf.mxu0
    %v2098 = vadd.f32 %v2084, %v2097
    %v2099 = vpop.f32.mrf.mxu0
    %v2100 = vadd.f32 %v2086, %v2099
    %2101 = vdwg.mxu0
    %2102 = vmatpush.bf16.msra.mxu0 %v1994
    %2103 = vmatpush.bf16.msra.mxu0 %v1992
    %2104 = vmatpush.bf16.msra.mxu0 %v1990
    %2105 = vmatpush.bf16.msra.mxu0 %v1988
    %2106 = vmatpush.bf16.msra.mxu0 %v1986
    %2107 = vmatpush.bf16.msra.mxu0 %v1984
    %2108 = vmatpush.bf16.msra.mxu0 %v1982
    %2109 = vmatpush.bf16.msra.mxu0 %v1980
    %2110 = vmatmul.bf16.gmra.mxu0 %v1669
    %v2111 = vpop.f32.mrf.mxu0
    %v2112 = vadd.f32 %v2098, %v2111
    %v2113 = vpop.f32.mrf.mxu0
    %v2114 = vadd.f32 %v2100, %v2113
    %2115 = vdwg.mxu0
    %2116 = vmatpush.bf16.msra.mxu0 %v1947
    %2117 = vmatpush.bf16.msra.mxu0 %v1945
    %2118 = vmatpush.bf16.msra.mxu0 %v1943
    %2119 = vmatpush.bf16.msra.mxu0 %v1941
    %2120 = vmatpush.bf16.msra.mxu0 %v1939
    %2121 = vmatpush.bf16.msra.mxu0 %v1937
    %2122 = vmatpush.bf16.msra.mxu0 %v1935
    %2123 = vmatpush.bf16.msra.mxu0 %v1933
    %2124 = vmatmul.bf16.gmra.mxu0 %v1666
    %v2125 = vpop.f32.mrf.mxu0
    %v2126 = vadd.f32 %v1737, %v2125
    %v2127 = vpop.f32.mrf.mxu0
    %v2128 = vadd.f32 %v1737, %v2127
    %2129 = vdwg.mxu0
    %2130 = vmatpush.bf16.msra.mxu0 %v1963
    %2131 = vmatpush.bf16.msra.mxu0 %v1961
    %2132 = vmatpush.bf16.msra.mxu0 %v1959
    %2133 = vmatpush.bf16.msra.mxu0 %v1957
    %2134 = vmatpush.bf16.msra.mxu0 %v1955
    %2135 = vmatpush.bf16.msra.mxu0 %v1953
    %2136 = vmatpush.bf16.msra.mxu0 %v1951
    %2137 = vmatpush.bf16.msra.mxu0 %v1949
    %2138 = vmatmul.bf16.gmra.mxu0 %v1667
    %v2139 = vpop.f32.mrf.mxu0
    %v2140 = vadd.f32 %v2126, %v2139
    %v2141 = vpop.f32.mrf.mxu0
    %v2142 = vadd.f32 %v2128, %v2141
    %2143 = vdwg.mxu0
    %2144 = vmatpush.bf16.msra.mxu0 %v1979
    %2145 = vmatpush.bf16.msra.mxu0 %v1977
    %2146 = vmatpush.bf16.msra.mxu0 %v1975
    %2147 = vmatpush.bf16.msra.mxu0 %v1973
    %2148 = vmatpush.bf16.msra.mxu0 %v1971
    %2149 = vmatpush.bf16.msra.mxu0 %v1969
    %2150 = vmatpush.bf16.msra.mxu0 %v1967
    %2151 = vmatpush.bf16.msra.mxu0 %v1965
    %2152 = vmatmul.bf16.gmra.mxu0 %v1668
    %v2153 = vpop.f32.mrf.mxu0
    %v2154 = vadd.f32 %v2140, %v2153
    %v2155 = vpop.f32.mrf.mxu0
    %v2156 = vadd.f32 %v2142, %v2155
    %2157 = vdwg.mxu0
    %2158 = vmatpush.bf16.msra.mxu0 %v1995
    %2159 = vmatpush.bf16.msra.mxu0 %v1993
    %2160 = vmatpush.bf16.msra.mxu0 %v1991
    %2161 = vmatpush.bf16.msra.mxu0 %v1989
    %2162 = vmatpush.bf16.msra.mxu0 %v1987
    %2163 = vmatpush.bf16.msra.mxu0 %v1985
    %2164 = vmatpush.bf16.msra.mxu0 %v1983
    %2165 = vmatpush.bf16.msra.mxu0 %v1981
    %2166 = vmatmul.bf16.gmra.mxu0 %v1669
    %v2167 = vpop.f32.mrf.mxu0
    %v2168 = vadd.f32 %v2154, %v2167
    %v2169 = vpop.f32.mrf.mxu0
    %v2170 = vadd.f32 %v2156, %v2169
    %2171 = vdwg.mxu0
    %v2172 = vmax.f32 %v2112, 0.0
    %v2173 = vmax.f32 %v2168, 0.0
    %v2174 = vmax.f32 %v2114, 0.0
    %v2175 = vmax.f32 %v2170, 0.0
    %v2176 = vpack.c.bf16 %v2174, %v2172
    %v2177 = vpack.c.bf16 %v2175, %v2173
    %v2178 = vld [vmem:[%s5] sm:$0xf]
    %v2179 = vld [vmem:[%s5 + $0x4] sm:$0xf]
    %v2180 = vld [vmem:[%s5 + $0x8] sm:$0xf]
    %v2181 = vld [vmem:[%s5 + $0xc] sm:$0xf]
    %v2182 = vld [vmem:[%s5 + $0x10] sm:$0xf]
    %v2183 = vld [vmem:[%s5 + $0x14] sm:$0xf]
    %v2184 = vld [vmem:[%s5 + $0x18] sm:$0xf]
    %v2185 = vld [vmem:[%s5 + $0x1c] sm:$0xf]
    %v2186 = vld [vmem:[%s5 + $0x20] sm:$0xf]
    %v2187 = vld [vmem:[%s5 + $0x24] sm:$0xf]
    %v2188 = vld [vmem:[%s5 + $0x28] sm:$0xf]
    %v2189 = vld [vmem:[%s5 + $0x2c] sm:$0xf]
    %v2190 = vld [vmem:[%s5 + $0x30] sm:$0xf]
    %v2191 = vld [vmem:[%s5 + $0x34] sm:$0xf]
    %v2192 = vld [vmem:[%s5 + $0x38] sm:$0xf]
    %v2193 = vld [vmem:[%s5 + $0x3c] sm:$0xf]
    %v2194 = vld [vmem:[%s5 + $0x40] sm:$0xf]
    %v2195 = vld [vmem:[%s5 + $0x44] sm:$0xf]
    %v2196 = vld [vmem:[%s5 + $0x48] sm:$0xf]
    %v2197 = vld [vmem:[%s5 + $0x4c] sm:$0xf]
    %v2198 = vld [vmem:[%s5 + $0x50] sm:$0xf]
    %v2199 = vld [vmem:[%s5 + $0x54] sm:$0xf]
    %v2200 = vld [vmem:[%s5 + $0x58] sm:$0xf]
    %v2201 = vld [vmem:[%s5 + $0x5c] sm:$0xf]
    %v2202 = vld [vmem:[%s5 + $0x60] sm:$0xf]
    %v2203 = vld [vmem:[%s5 + $0x64] sm:$0xf]
    %v2204 = vld [vmem:[%s5 + $0x68] sm:$0xf]
    %v2205 = vld [vmem:[%s5 + $0x6c] sm:$0xf]
    %v2206 = vld [vmem:[%s5 + $0x70] sm:$0xf]
    %v2207 = vld [vmem:[%s5 + $0x74] sm:$0xf]
    %v2208 = vld [vmem:[%s5 + $0x78] sm:$0xf]
    %v2209 = vld [vmem:[%s5 + $0x7c] sm:$0xf]
    %v2210 = vld [vmem:[%s6] sm:$0x1]
    %v2212 = vperm.slane %v2210, 0
    %v2246 = vunpack.c.l.b16 %v2178
    %v2247 = vunpack.c.l.b16 %v2179
    %v2248 = vunpack.c.l.b16 %v2180
    %v2249 = vunpack.c.l.b16 %v2181
    %v2250 = vunpack.c.l.b16 %v2182
    %v2251 = vunpack.c.l.b16 %v2183
    %v2252 = vunpack.c.l.b16 %v2184
    %v2253 = vunpack.c.l.b16 %v2185
    %v2254 = vunpack.c.l.b16 %v2186
    %v2255 = vunpack.c.l.b16 %v2187
    %v2256 = vunpack.c.l.b16 %v2188
    %v2257 = vunpack.c.l.b16 %v2189
    %v2258 = vunpack.c.l.b16 %v2190
    %v2259 = vunpack.c.l.b16 %v2191
    %v2260 = vunpack.c.l.b16 %v2192
    %v2261 = vunpack.c.l.b16 %v2193
    %v2262 = vunpack.c.l.b16 %v2194
    %v2263 = vunpack.c.l.b16 %v2195
    %v2264 = vunpack.c.l.b16 %v2196
    %v2265 = vunpack.c.l.b16 %v2197
    %v2266 = vunpack.c.l.b16 %v2198
    %v2267 = vunpack.c.l.b16 %v2199
    %v2268 = vunpack.c.l.b16 %v2200
    %v2269 = vunpack.c.l.b16 %v2201
    %v2270 = vunpack.c.l.b16 %v2202
    %v2271 = vunpack.c.l.b16 %v2203
    %v2272 = vunpack.c.l.b16 %v2204
    %v2273 = vunpack.c.l.b16 %v2205
    %v2274 = vunpack.c.l.b16 %v2206
    %v2275 = vunpack.c.l.b16 %v2207
    %v2276 = vunpack.c.l.b16 %v2208
    %v2277 = vunpack.c.l.b16 %v2209
    %v2278 = vpack.c.b16 %v2247, %v2246
    %v2279 = vpack.c.b16 %v2249, %v2248
    %v2280 = vpack.c.b16 %v2251, %v2250
    %v2281 = vpack.c.b16 %v2253, %v2252
    %v2282 = vpack.c.b16 %v2255, %v2254
    %v2283 = vpack.c.b16 %v2257, %v2256
    %v2284 = vpack.c.b16 %v2259, %v2258
    %v2285 = vpack.c.b16 %v2261, %v2260
    %v2286 = vpack.c.b16 %v2263, %v2262
    %v2287 = vpack.c.b16 %v2265, %v2264
    %v2288 = vpack.c.b16 %v2267, %v2266
    %v2289 = vpack.c.b16 %v2269, %v2268
    %v2290 = vpack.c.b16 %v2271, %v2270
    %v2291 = vpack.c.b16 %v2273, %v2272
    %v2292 = vpack.c.b16 %v2275, %v2274
    %v2293 = vpack.c.b16 %v2277, %v2276
    %2310 = vmatpush.bf16.msra.mxu0 %v2285
    %2311 = vmatpush.bf16.msra.mxu0 %v2284
    %2312 = vmatpush.bf16.msra.mxu0 %v2283
    %2313 = vmatpush.bf16.msra.mxu0 %v2282
    %2314 = vmatpush.bf16.msra.mxu0 %v2281
    %2315 = vmatpush.bf16.msra.mxu0 %v2280
    %2316 = vmatpush.bf16.msra.mxu0 %v2279
    %2317 = vmatpush.bf16.msra.mxu0 %v2278
    %2318 = vmatmul.bf16.gmra.mxu0 %v2176
    %v2319 = vpop.f32.mrf.mxu0
    %v2320 = vadd.f32 %v2212, %v2319
    %v2321 = vpop.f32.mrf.mxu0
    %v2322 = vadd.f32 %v2212, %v2321
    %2323 = vdwg.mxu0
    %2324 = vmatpush.bf16.msra.mxu0 %v2293
    %2325 = vmatpush.bf16.msra.mxu0 %v2292
    %2326 = vmatpush.bf16.msra.mxu0 %v2291
    %2327 = vmatpush.bf16.msra.mxu0 %v2290
    %2328 = vmatpush.bf16.msra.mxu0 %v2289
    %2329 = vmatpush.bf16.msra.mxu0 %v2288
    %2330 = vmatpush.bf16.msra.mxu0 %v2287
    %2331 = vmatpush.bf16.msra.mxu0 %v2286
    %2332 = vmatmul.bf16.gmra.mxu0 %v2177
    %v2333 = vpop.f32.mrf.mxu0
    %v2334 = vadd.f32 %v2320, %v2333
    %v2335 = vpop.f32.mrf.mxu0
    %v2336 = vadd.f32 %v2322, %v2335
    %2337 = vdwg.mxu0
    %v2338 = vmax.f32 %v2334, 0.0
    %v2339 = vmax.f32 %v2336, 0.0
    %v2340 = vpack.c.bf16 %v2339, %v2338
    %v2341 = vld [vmem:[%s7] sm:$0xf]
    %v2342 = vld [vmem:[%s7 + $0x4] sm:$0xf]
    %v2343 = vld [vmem:[%s7 + $0x8] sm:$0xf]
    %v2344 = vld [vmem:[%s7 + $0xc] sm:$0xf]
    %v2345 = vld [vmem:[%s7 + $0x10] sm:$0xf]
    %v2346 = vld [vmem:[%s7 + $0x14] sm:$0xf]
    %v2347 = vld [vmem:[%s7 + $0x18] sm:$0xf]
    %v2348 = vld [vmem:[%s7 + $0x1c] sm:$0xf]
    %v2349 = vld [vmem:[%s7 + $0x20] sm:$0xf]
    %v2350 = vld [vmem:[%s7 + $0x24] sm:$0xf]
    %v2351 = vld [vmem:[%s7 + $0x28] sm:$0xf]
    %v2352 = vld [vmem:[%s7 + $0x2c] sm:$0xf]
    %v2353 = vld [vmem:[%s7 + $0x30] sm:$0xf]
    %v2354 = vld [vmem:[%s7 + $0x34] sm:$0xf]
    %v2355 = vld [vmem:[%s7 + $0x38] sm:$0xf]
    %v2356 = vld [vmem:[%s7 + $0x3c] sm:$0xf]
    %v2357 = vld [vmem:[%s8] sm:$0x1]
    %v2359 = vperm.slane %v2357, 0
    %v2377 = vunpack.c.l.b16 %v2341
    %v2378 = vunpack.c.l.b16 %v2342
    %v2379 = vunpack.c.l.b16 %v2343
    %v2380 = vunpack.c.l.b16 %v2344
    %v2381 = vunpack.c.l.b16 %v2345
    %v2382 = vunpack.c.l.b16 %v2346
    %v2383 = vunpack.c.l.b16 %v2347
    %v2384 = vunpack.c.l.b16 %v2348
    %v2385 = vunpack.c.l.b16 %v2349
    %v2386 = vunpack.c.l.b16 %v2350
    %v2387 = vunpack.c.l.b16 %v2351
    %v2388 = vunpack.c.l.b16 %v2352
    %v2389 = vunpack.c.l.b16 %v2353
    %v2390 = vunpack.c.l.b16 %v2354
    %v2391 = vunpack.c.l.b16 %v2355
    %v2392 = vunpack.c.l.b16 %v2356
    %v2393 = vpack.c.b16 %v2378, %v2377
    %v2394 = vpack.c.b16 %v2380, %v2379
    %v2395 = vpack.c.b16 %v2382, %v2381
    %v2396 = vpack.c.b16 %v2384, %v2383
    %v2397 = vpack.c.b16 %v2386, %v2385
    %v2398 = vpack.c.b16 %v2388, %v2387
    %v2399 = vpack.c.b16 %v2390, %v2389
    %v2400 = vpack.c.b16 %v2392, %v2391
    %2409 = vmatpush.bf16.msra.mxu0 %v2400
    %2410 = vmatpush.bf16.msra.mxu0 %v2399
    %2411 = vmatpush.bf16.msra.mxu0 %v2398
    %2412 = vmatpush.bf16.msra.mxu0 %v2397
    %2413 = vmatpush.bf16.msra.mxu0 %v2396
    %2414 = vmatpush.bf16.msra.mxu0 %v2395
    %2415 = vmatpush.bf16.msra.mxu0 %v2394
    %2416 = vmatpush.bf16.msra.mxu0 %v2393
    %2417 = vmatmul.bf16.gmra.mxu0 %v2340
    %v2418 = vpop.f32.mrf.mxu0
    %v2419 = vadd.f32 %v2359, %v2418
    %v2420 = vpop.f32.mrf.mxu0
    %v2421 = vadd.f32 %v2359, %v2420
    %2422 = vdwg.mxu0
    %v2423 = vmax.f32 %v2419, 0.0
    %v2424 = vmax.f32 %v2421, 0.0
    %v2425 = vpack.c.bf16 %v2424, %v2423
    %v2426 = vld [vmem:[%s9] sm:$0xf]
    %v2427 = vld [vmem:[%s9 + $0x4] sm:$0xf]
    %v2428 = vld [vmem:[%s9 + $0x8] sm:$0xf]
    %v2429 = vld [vmem:[%s9 + $0xc] sm:$0xf]
    %v2430 = vld [vmem:[%s9 + $0x10] sm:$0xf]
    %v2431 = vld [vmem:[%s9 + $0x14] sm:$0xf]
    %v2432 = vld [vmem:[%s9 + $0x18] sm:$0xf]
    %v2433 = vld [vmem:[%s9 + $0x1c] sm:$0xf]
    %v2434 = vld [vmem:[%s9 + $0x20] sm:$0xf]
    %v2435 = vld [vmem:[%s9 + $0x24] sm:$0xf]
    %v2436 = vld [vmem:[%s9 + $0x28] sm:$0xf]
    %v2437 = vld [vmem:[%s9 + $0x2c] sm:$0xf]
    %v2438 = vld [vmem:[%s9 + $0x30] sm:$0xf]
    %v2439 = vld [vmem:[%s9 + $0x34] sm:$0xf]
    %v2440 = vld [vmem:[%s9 + $0x38] sm:$0xf]
    %v2441 = vld [vmem:[%s9 + $0x3c] sm:$0xf]
    %v2442 = vld [vmem:[%s10] sm:$0x1]
    %v2444 = vperm.slane %v2442, 0
    %v2462 = vunpack.c.l.b16 %v2426
    %v2463 = vunpack.c.l.b16 %v2427
    %v2464 = vunpack.c.l.b16 %v2428
    %v2465 = vunpack.c.l.b16 %v2429
    %v2466 = vunpack.c.l.b16 %v2430
    %v2467 = vunpack.c.l.b16 %v2431
    %v2468 = vunpack.c.l.b16 %v2432
    %v2469 = vunpack.c.l.b16 %v2433
    %v2470 = vunpack.c.l.b16 %v2434
    %v2471 = vunpack.c.l.b16 %v2435
    %v2472 = vunpack.c.l.b16 %v2436
    %v2473 = vunpack.c.l.b16 %v2437
    %v2474 = vunpack.c.l.b16 %v2438
    %v2475 = vunpack.c.l.b16 %v2439
    %v2476 = vunpack.c.l.b16 %v2440
    %v2477 = vunpack.c.l.b16 %v2441
    %v2478 = vpack.c.b16 %v2463, %v2462
    %v2479 = vpack.c.b16 %v2465, %v2464
    %v2480 = vpack.c.b16 %v2467, %v2466
    %v2481 = vpack.c.b16 %v2469, %v2468
    %v2482 = vpack.c.b16 %v2471, %v2470
    %v2483 = vpack.c.b16 %v2473, %v2472
    %v2484 = vpack.c.b16 %v2475, %v2474
    %v2485 = vpack.c.b16 %v2477, %v2476
    %2494 = vmatpush.bf16.msra.mxu0 %v2485
    %2495 = vmatpush.bf16.msra.mxu0 %v2484
    %2496 = vmatpush.bf16.msra.mxu0 %v2483
    %2497 = vmatpush.bf16.msra.mxu0 %v2482
    %2498 = vmatpush.bf16.msra.mxu0 %v2481
    %2499 = vmatpush.bf16.msra.mxu0 %v2480
    %2500 = vmatpush.bf16.msra.mxu0 %v2479
    %2501 = vmatpush.bf16.msra.mxu0 %v2478
    %2502 = vmatmul.bf16.gmra.mxu0 %v2425
    %v2503 = vpop.f32.mrf.mxu0
    %v2504 = vadd.f32 %v2444, %v2503
    %v2505 = vpop.f32.mrf.mxu0
    %v2506 = vadd.f32 %v2444, %v2505
    %2507 = vdwg.mxu0
    %2508 = vmax.xlane.f32.xlu0 %v2504
    %v2509 = vpop.xlane.xlu0 %2508
    %2510 = vmax.xlane.f32.xlu0 %v2506
    %v2511 = vpop.xlane.xlu0 %2510
    %v2512 = vsub.f32 %v2504, %v2509
    %v2513 = vsub.f32 %v2506, %v2511
    %v2514 = vmul.f32 %v2512, 1.442695
    %v2515 = vpow.pop %v2514
    %v2516 = vmul.f32 %v2513, 1.442695
    %v2517 = vpow.pop %v2516
    %2518 = vadd.xlane.f32.xlu0 %v2515
    %v2519 = vpop.xlane.xlu0 %2518
    %2520 = vadd.xlane.f32.xlu0 %v2517
    %v2521 = vpop.xlane.xlu0 %2520
    %v2522 = vlog2.pop %v2519
    %v2523 = vmul.f32 %v2522, 0.6931472
    %v2524 = vlog2.pop %v2521
    %v2525 = vmul.f32 %v2524, 0.6931472
    %v2526 = vadd.f32 %v2509, %v2523
    %v2527 = vadd.f32 %v2511, %v2525
    %v2528 = vsub.f32 %v2504, %v2526
    %v2529 = vsub.f32 %v2506, %v2527
    %2530 = vst [vmem:[%s11] sm:$0xff] %v2528
    %2531 = vst [vmem:[%s11 + $0x8] sm:$0xff] %v2529
    // Predicated region
    $region50: #{enhanced_mlp_forward.1} parent=1 // pred_check
      _
    $region51: #{enhanced_mlp_forward.1} parent=1 // pred_check_branch
      %2533 = sbr.rel (0) target = $region53
    $region52: #{enhanced_mlp_forward.1} parent=1 // pred_region
      _
    $region53: #{enhanced_mlp_forward.1} parent=1 // pred_fallthru
      _
    // Predicated region
    $region54: #{enhanced_mlp_forward.1} parent=1 // pred_check
      _
    $region55: #{enhanced_mlp_forward.1} parent=1 // pred_check_branch
      %2535 = sbr.rel (0) target = $region57
    $region56: #{enhanced_mlp_forward.1} parent=1 // pred_region
      _
    $region57: #{enhanced_mlp_forward.1} parent=1 // pred_fallthru
      _
    %2536 = vsyncpa [#allocation3], 1

</llo_original>
